<compile_context>
chip_gen: v5e
topology: v5e:2x2
jax: 0.10.0
libtpu: 0.0.40
codegen_flags: <defaults>
</compile_context>

<pallas_src>
import jax
import jax.numpy as jnp
from jax import lax
from jax.experimental import pallas as pl
from jax.experimental.pallas import tpu as pltpu


# ----------------------------------------------------------------------------
# helpers
# ----------------------------------------------------------------------------

def _round_up(n: int, m: int) -> int:
    return ((n + m - 1) // m) * m


def _choose_time_block(T: int, cap: int):
    """Pick (bt, Tp) with bt <= cap and Tp = round_up(T, bt), trading padded
    (wasted) recurrence steps against per-grid-step overhead."""
    cap = max(1, min(cap, T))
    best_bt, best_cost = 1, None
    for bt in range(1, cap + 1):
        Tp = _round_up(T, bt)
        cost = Tp + 4 * (Tp // bt)   # executed steps + ~grid-step overhead proxy
        if best_cost is None or cost < best_cost:
            best_bt, best_cost = bt, cost
    return best_bt, _round_up(T, best_bt)


# ----------------------------------------------------------------------------
# Fused kernel: per (batch-block, time-block) grid step, project the x block
# with one MXU matmul, then run the sequential recurrence with h carried in
# f32 VMEM scratch.
# ----------------------------------------------------------------------------

def _rnn_fused_kernel(x_ref, h0_ref, wxh_ref, whh_ref, b_ref, outs_ref,
                      h_scratch, xp_scratch):
    # grid = (batch_blocks, time_blocks); time (axis 1) runs sequentially.
    @pl.when(pl.program_id(1) == 0)
    def _():
        h_scratch[...] = h0_ref[...].astype(jnp.float32)

    bt, bb, dp = x_ref.shape
    hp = whh_ref.shape[1]

    # Fused input projection for the whole time block: one (bt*bb, dp) MXU
    # matmul (not per-step row-starved matmuls), bias folded in, f32 accum.
    x2d = x_ref[...].reshape(bt * bb, dp)
    xp = jnp.dot(x2d, wxh_ref[...], preferred_element_type=jnp.float32)
    xp_scratch[...] = (xp + b_ref[...]).reshape(bt, bb, hp)

    whh = whh_ref[...]            # resident; recurrent matmul in whh.dtype
    rdt = whh.dtype

    def step(t, h):
        hh = jnp.dot(h.astype(rdt), whh, preferred_element_type=jnp.float32)
        h_new = jnp.tanh(xp_scratch[t] + hh)
        outs_ref[t] = h_new.astype(outs_ref.dtype)
        return h_new

    # NOTE: at very small batch blocks the W_hh streaming per step could be
    # further amortized with pltpu.matmul_push_rhs / matmul_acc_lhs; not needed
    # at these sizes.
    unroll = True if bt <= 32 else 8
    h_final = lax.fori_loop(0, bt, step, h_scratch[...], unroll=unroll)
    h_scratch[...] = h_final


def _recurrence(xq, h0, wxh, whh, bias, *, bt, bb, out_dtype):
    """xq: (Tp, Bp, Dp), h0: (Bp, Hp) f32, wxh: (Dp, Hp), whh: (Hp, Hp),
    bias: (1, Hp) f32.  Returns outs: (Tp, Bp, Hp) in out_dtype."""
    Tp, Bp, Dp = xq.shape
    Hp = whh.shape[1]
    out_itemsize = jnp.dtype(out_dtype).itemsize

    def build(single_buffer_resident: bool):
        def resident_spec(shape, index_map):
            # Arrays whose block index never changes along the sequential time
            # axis: single-buffer them so the Hp*Hp / Dp*Hp weights are not
            # allocated twice in VMEM (important on v7x's 64 MiB VMEM).
            if single_buffer_resident:
                return pl.BlockSpec(shape, index_map,
                                    pipeline_mode=pl.Buffered(1))
            return pl.BlockSpec(shape, index_map)

        n_res = 1 if single_buffer_resident else 2
        vmem_need = (
            2 * bt * bb * Dp * xq.dtype.itemsize            # x block (2 bufs)
            + 2 * bt * bb * Hp * out_itemsize               # out block (2 bufs)
            + n_res * (bb * Hp * 4                          # h0
                       + Dp * Hp * wxh.dtype.itemsize       # W_xh
                       + Hp * Hp * whh.dtype.itemsize       # W_hh
                       + 8 * Hp * 4)                        # bias (padded tile)
            + bb * Hp * 4 + bt * bb * Hp * 4                # h / xproj scratch
        )
        vmem_limit = None
        if vmem_need > 12 * 1024 * 1024:
            # Above the most conservative default scoped limit: request what we
            # need plus headroom, capped at v7x's 64 MiB physical VMEM.
            vmem_limit = int(min(vmem_need * 1.5, 64 * 1024 * 1024))

        grid_spec = pltpu.PrefetchScalarGridSpec(
            num_scalar_prefetch=0,
            grid=(Bp // bb, Tp // bt),
            in_specs=[
                pl.BlockSpec((bt, bb, Dp), lambda b, t: (t, b, 0)),   # x block
                resident_spec((bb, Hp), lambda b, t: (b, 0)),         # h0
                resident_spec((Dp, Hp), lambda b, t: (0, 0)),         # W_xh
                resident_spec((Hp, Hp), lambda b, t: (0, 0)),         # W_hh
                resident_spec((1, Hp), lambda b, t: (0, 0)),          # bias
            ],
            out_specs=pl.BlockSpec((bt, bb, Hp), lambda b, t: (t, b, 0)),
            scratch_shapes=[
                pltpu.VMEM((bb, Hp), jnp.float32),       # h carry (f32)
                pltpu.VMEM((bt, bb, Hp), jnp.float32),   # projected time block
            ],
        )
        return pl.pallas_call(
            _rnn_fused_kernel,
            out_shape=jax.ShapeDtypeStruct((Tp, Bp, Hp), out_dtype),
            grid_spec=grid_spec,
            compiler_params=pltpu.CompilerParams(
                # batch blocks are independent -> parallel (v7x megacore can
                # split when Bp//bb >= 2); time recurrence is sequential.
                dimension_semantics=("parallel", "arbitrary"),
                vmem_limit_bytes=vmem_limit),
        )

    if hasattr(pl, "Buffered"):
        try:
            return build(True)(xq, h0, wxh, whh, bias)
        except Exception:
            pass   # pipeline_mode / Buffered(1) unsupported -> default pipeline
    return build(False)(xq, h0, wxh, whh, bias)


# ----------------------------------------------------------------------------
# Wrapper
# ----------------------------------------------------------------------------

def rnn_forward_pallas(x, h0, w_xh, w_hh, b_h, *,
                       compute_dtype=jnp.bfloat16,
                       recurrent_dtype=None,
                       out_dtype=None,
                       block_t=32,
                       block_b=None):
    """x: (T, B, D), h0: (B, H), w_xh: (D, H), w_hh: (H, H), b_h: (H,).

    Returns (outs: (T, B, H), state: (B, H)).

    compute_dtype:   dtype of x / W_xh for the MXU projection (f32 accumulate).
    recurrent_dtype: dtype of W_hh / h for the recurrent matmul; defaults to
                     compute_dtype — pass jnp.float32 for very long sequences.
    out_dtype:       dtype of the written-back outs; defaults to x.dtype (pass
                     jnp.bfloat16 to halve the dominant HBM writeback stream).
    block_b:         batch block; default = full padded batch (best on 1-TC
                     v5e/v6e).  On v7x pass padded_batch // 2 so the parallel
                     batch axis has >= 2 blocks for megacore.
    """
    T, B, D = x.shape
    H = w_xh.shape[1]
    out_dtype = x.dtype if out_dtype is None else jnp.dtype(out_dtype)
    cd = jnp.dtype(compute_dtype)
    rd = cd if recurrent_dtype is None else jnp.dtype(recurrent_dtype)

    # --- hardware-tile-friendly padded sizes ---------------------------------
    bt, Tp = _choose_time_block(T, block_t)
    b_align = 16 if cd.itemsize < 4 else 8   # bf16 native tiling is (16, 128)
    Bp = _round_up(B, b_align)
    Dp = _round_up(D, 128)
    Hp = _round_up(H, 128)
    bb = Bp if block_b is None else block_b
    assert Bp % bb == 0 and bb % b_align == 0, (
        "block_b must be a multiple of %d that divides the padded batch %d"
        % (b_align, Bp))

    def pad2(a, rows, cols):
        if a.shape == (rows, cols):
            return a
        return jnp.pad(a, ((0, rows - a.shape[0]), (0, cols - a.shape[1])))

    xq = x.astype(cd)
    if (Tp, Bp, Dp) != (T, B, D):
        xq = jnp.pad(xq, ((0, Tp - T), (0, Bp - B), (0, Dp - D)))
    wxh_p = pad2(w_xh.astype(cd), Dp, Hp)
    whh_p = pad2(w_hh.astype(rd), Hp, Hp)
    b_p = b_h.astype(jnp.float32)
    if Hp != H:
        b_p = jnp.pad(b_p, (0, Hp - H))
    b_p = b_p.reshape(1, Hp)
    h0_p = pad2(h0.astype(jnp.float32), Bp, Hp)

    outs_p = _recurrence(xq, h0_p, wxh_p, whh_p, b_p,
                         bt=bt, bb=bb, out_dtype=out_dtype)

    # Final state is outs[T-1]; fast path avoids the full-output slice copy
    # when every dimension is already tile-aligned.
    if (Tp, Bp, Hp) == (T, B, H):
        return outs_p, outs_p[T - 1]
    state = outs_p[T - 1, :B, :H]
    outs = outs_p[:T, :B, :H]
    return outs, state


class RNNBase:
    """JAX/Pallas port of the PyTorch RNNBase (vanilla tanh RNN realization)."""

    def __init__(self, inputs_dim: int, hidden_dim: int, key):
        self.inputs_dim = inputs_dim
        self.hidden_dim = hidden_dim
        k1, k2 = jax.random.split(key)
        scale = 0.01
        self.w_xh = scale * jax.random.normal(k1, (inputs_dim, hidden_dim), jnp.float32)
        self.w_hh = scale * jax.random.normal(k2, (hidden_dim, hidden_dim), jnp.float32)
        self.b_h = jnp.zeros((hidden_dim,), jnp.float32)

    def init_state(self, x):
        # x: (T, B, D) -> zero state (B, H)
        return jnp.zeros((x.shape[1], self.hidden_dim), x.dtype)

    def compute(self, x, state):
        return rnn_forward_pallas(x, state, self.w_xh, self.w_hh, self.b_h)

    def forward(self, x, state=None):
        state = self.init_state(x) if state is None else state
        outs, state = self.compute(x, state)
        return (outs, state)


def _reference_forward(x, h0, w_xh, w_hh, b_h):
    def step(h, x_t):
        h_new = jnp.tanh(x_t @ w_xh + h @ w_hh + b_h)
        return h_new, h_new
    hT, outs = jax.lax.scan(step, h0, x)
    return outs, hT


if __name__ == "__main__":
    key = jax.random.PRNGKey(0)
    k_param, k_x = jax.random.split(key)

    seq, batch, inputs_dim, hidden_dim = 8, 2, 16, 32
    model = RNNBase(inputs_dim, hidden_dim, k_param)

    x = jax.random.normal(k_x, (seq, batch, inputs_dim), jnp.float32)

    outs, state = model.forward(x)
    outs = jax.block_until_ready(outs)
    state = jax.block_until_ready(state)

    # Sanity check against a pure-JAX f32 reference (kernel computes in bf16
    # with f32 accumulation, so use a bf16-appropriate tolerance).
    ref_outs, ref_state = _reference_forward(
        x, model.init_state(x), model.w_xh, model.w_hh, model.b_h)
    assert outs.shape == (seq, batch, hidden_dim)
    assert state.shape == (batch, hidden_dim)
    assert jnp.allclose(outs, ref_outs, atol=2e-2, rtol=2e-2)
    assert jnp.allclose(state, ref_state, atol=2e-2, rtol=2e-2)

    print("KERNEL_OK")
</pallas_src>

<mosaic_0001>
module attributes {stable_mosaic.version = 11 : i64} {
  func.func @_rnn_fused_kernel(%arg0: i32, %arg1: i32, %arg2: memref<8x16x128xbf16, #tpu.memory_space<vmem>>, %arg3: memref<16x128xf32, #tpu.memory_space<vmem>>, %arg4: memref<128x128xbf16, #tpu.memory_space<vmem>>, %arg5: memref<128x128xbf16, #tpu.memory_space<vmem>>, %arg6: memref<1x128xf32, #tpu.memory_space<vmem>>, %arg7: memref<8x16x128xf32, #tpu.memory_space<vmem>>, %arg8: memref<16x128xf32, #tpu.memory_space<vmem>>, %arg9: memref<8x16x128xf32, #tpu.memory_space<vmem>>) attributes {dimension_semantics = [#tpu.dimension_semantics<parallel>, #tpu.dimension_semantics<arbitrary>], iteration_bounds = array<i64: 1, 1>, scalar_prefetch = 0 : i64, scratch_operands = 2 : i64, tpu.core_type = #tpu.core_type<tc>, window_params = [{transform_indices = @transform_0, window_bounds = array<i64: 8, 16, 128>}, {pipeline_mode = #tpu.pipeline_mode<synchronous>, transform_indices = @transform_1, window_bounds = array<i64: 16, 128>}, {pipeline_mode = #tpu.pipeline_mode<synchronous>, transform_indices = @transform_2, window_bounds = array<i64: 128, 128>}, {pipeline_mode = #tpu.pipeline_mode<synchronous>, transform_indices = @transform_3, window_bounds = array<i64: 128, 128>}, {pipeline_mode = #tpu.pipeline_mode<synchronous>, transform_indices = @transform_4, window_bounds = array<i64: 1, 128>}, {transform_indices = @transform_5, window_bounds = array<i64: 8, 16, 128>}]} {
    %c0_i32 = arith.constant 0 : i32
    %0 = arith.cmpi eq, %arg1, %c0_i32 : i32
    %1 = arith.extui %0 : i1 to i32
    %c0_i32_0 = arith.constant 0 : i32
    %2 = arith.cmpi ne, %1, %c0_i32_0 : i32
    scf.if %2 {
      %c0_57 = arith.constant 0 : index
      %c0_58 = arith.constant 0 : index
      %103 = vector.load %arg3[%c0_57, %c0_58] : memref<16x128xf32, #tpu.memory_space<vmem>>, vector<16x128xf32>
      %c0_59 = arith.constant 0 : index
      %c0_60 = arith.constant 0 : index
      %104 = vector.load %arg8[%c0_59, %c0_60] : memref<16x128xf32, #tpu.memory_space<vmem>>, vector<16x128xf32>
      tpu.vector_store %arg8[%c0_59, %c0_60], %103 {strides = array<i32>} : memref<16x128xf32, #tpu.memory_space<vmem>>, vector<16x128xf32>,
    } else {
    }
    %c0 = arith.constant 0 : index
    %c0_1 = arith.constant 0 : index
    %c0_2 = arith.constant 0 : index
    %3 = vector.load %arg2[%c0, %c0_1, %c0_2] : memref<8x16x128xbf16, #tpu.memory_space<vmem>>, vector<8x16x128xbf16>
    %4 = vector.shape_cast %3 : vector<8x16x128xbf16> to vector<128x128xbf16>
    %c0_3 = arith.constant 0 : index
    %c0_4 = arith.constant 0 : index
    %5 = vector.load %arg4[%c0_3, %c0_4] : memref<128x128xbf16, #tpu.memory_space<vmem>>, vector<128x128xbf16>
    %cst = arith.constant dense<0.000000e+00> : vector<128x128xf32>
    %6 = tpu.matmul %4, %5, %cst {dimension_numbers = #tpu.dot_dimension_numbers<[1], [0], [0], [1], [0, 0, 1, 1], [], []>} : vector<128x128xbf16>, vector<128x128xbf16>, vector<128x128xf32> -> vector<128x128xf32>
    %c0_5 = arith.constant 0 : index
    %c0_6 = arith.constant 0 : index
    %7 = vector.load %arg6[%c0_5, %c0_6] : memref<1x128xf32, #tpu.memory_space<vmem>>, vector<1x128xf32>
    %8 = vector.broadcast %7 : vector<1x128xf32> to vector<128x128xf32>
    %9 = arith.addf %6, %8 : vector<128x128xf32>
    %10 = vector.shape_cast %9 : vector<128x128xf32> to vector<8x16x128xf32>
    %c0_7 = arith.constant 0 : index
    %c0_8 = arith.constant 0 : index
    %c0_9 = arith.constant 0 : index
    %11 = vector.load %arg9[%c0_7, %c0_8, %c0_9] : memref<8x16x128xf32, #tpu.memory_space<vmem>>, vector<8x16x128xf32>
    tpu.vector_store %arg9[%c0_7, %c0_8, %c0_9], %10 {strides = array<i32>} : memref<8x16x128xf32, #tpu.memory_space<vmem>>, vector<8x16x128xf32>,
    %c0_10 = arith.constant 0 : index
    %c0_11 = arith.constant 0 : index
    %12 = vector.load %arg5[%c0_10, %c0_11] : memref<128x128xbf16, #tpu.memory_space<vmem>>, vector<128x128xbf16>
    %c0_12 = arith.constant 0 : index
    %c0_13 = arith.constant 0 : index
    %13 = vector.load %arg8[%c0_12, %c0_13] : memref<16x128xf32, #tpu.memory_space<vmem>>, vector<16x128xf32>
    %c0_i32_14 = arith.constant 0 : i32
    %14 = arith.truncf %13 : vector<16x128xf32> to vector<16x128xbf16>
    %cst_15 = arith.constant dense<0.000000e+00> : vector<16x128xf32>
    %15 = tpu.matmul %14, %12, %cst_15 {dimension_numbers = #tpu.dot_dimension_numbers<[1], [0], [0], [1], [0, 0, 1, 1], [], []>} : vector<16x128xbf16>, vector<128x128xbf16>, vector<16x128xf32> -> vector<16x128xf32>
    %16 = arith.index_cast %c0_i32_14 : i32 to index
    %c0_16 = arith.constant 0 : index
    %c0_17 = arith.constant 0 : index
    %17 = vector.load %arg9[%16, %c0_16, %c0_17] : memref<8x16x128xf32, #tpu.memory_space<vmem>>, vector<1x16x128xf32>
    %18 = vector.shape_cast %17 : vector<1x16x128xf32> to vector<16x128xf32>
    %19 = arith.addf %18, %15 : vector<16x128xf32>
    %20 = math.tanh %19 : vector<16x128xf32>
    %21 = arith.index_cast %c0_i32_14 : i32 to index
    %c0_18 = arith.constant 0 : index
    %c0_19 = arith.constant 0 : index
    %22 = vector.load %arg7[%21, %c0_18, %c0_19] : memref<8x16x128xf32, #tpu.memory_space<vmem>>, vector<1x16x128xf32>
    %23 = vector.shape_cast %22 : vector<1x16x128xf32> to vector<16x128xf32>
    %24 = vector.shape_cast %20 : vector<16x128xf32> to vector<1x16x128xf32>
    tpu.vector_store %arg7[%21, %c0_18, %c0_19], %24 {strides = array<i32>} : memref<8x16x128xf32, #tpu.memory_space<vmem>>, vector<1x16x128xf32>,
    %c1_i32 = arith.constant 1 : i32
    %25 = arith.truncf %20 : vector<16x128xf32> to vector<16x128xbf16>
    %cst_20 = arith.constant dense<0.000000e+00> : vector<16x128xf32>
    %26 = tpu.matmul %25, %12, %cst_20 {dimension_numbers = #tpu.dot_dimension_numbers<[1], [0], [0], [1], [0, 0, 1, 1], [], []>} : vector<16x128xbf16>, vector<128x128xbf16>, vector<16x128xf32> -> vector<16x128xf32>
    %27 = arith.index_cast %c1_i32 : i32 to index
    %c0_21 = arith.constant 0 : index
    %c0_22 = arith.constant 0 : index
    %28 = vector.load %arg9[%27, %c0_21, %c0_22] : memref<8x16x128xf32, #tpu.memory_space<vmem>>, vector<1x16x128xf32>
    %29 = vector.shape_cast %28 : vector<1x16x128xf32> to vector<16x128xf32>
    %30 = arith.addf %29, %26 : vector<16x128xf32>
    %31 = math.tanh %30 : vector<16x128xf32>
    %32 = arith.index_cast %c1_i32 : i32 to index
    %c0_23 = arith.constant 0 : index
    %c0_24 = arith.constant 0 : index
    %33 = vector.load %arg7[%32, %c0_23, %c0_24] : memref<8x16x128xf32, #tpu.memory_space<vmem>>, vector<1x16x128xf32>
    %34 = vector.shape_cast %33 : vector<1x16x128xf32> to vector<16x128xf32>
    %35 = vector.shape_cast %31 : vector<16x128xf32> to vector<1x16x128xf32>
    tpu.vector_store %arg7[%32, %c0_23, %c0_24], %35 {strides = array<i32>} : memref<8x16x128xf32, #tpu.memory_space<vmem>>, vector<1x16x128xf32>,
    %c2_i32 = arith.constant 2 : i32
    %36 = arith.truncf %31 : vector<16x128xf32> to vector<16x128xbf16>
    %cst_25 = arith.constant dense<0.000000e+00> : vector<16x128xf32>
    %37 = tpu.matmul %36, %12, %cst_25 {dimension_numbers = #tpu.dot_dimension_numbers<[1], [0], [0], [1], [0, 0, 1, 1], [], []>} : vector<16x128xbf16>, vector<128x128xbf16>, vector<16x128xf32> -> vector<16x128xf32>
    %38 = arith.index_cast %c2_i32 : i32 to index
    %c0_26 = arith.constant 0 : index
    %c0_27 = arith.constant 0 : index
    %39 = vector.load %arg9[%38, %c0_26, %c0_27] : memref<8x16x128xf32, #tpu.memory_space<vmem>>, vector<1x16x128xf32>
    %40 = vector.shape_cast %39 : vector<1x16x128xf32> to vector<16x128xf32>
    %41 = arith.addf %40, %37 : vector<16x128xf32>
    %42 = math.tanh %41 : vector<16x128xf32>
    %43 = arith.index_cast %c2_i32 : i32 to index
    %c0_28 = arith.constant 0 : index
    %c0_29 = arith.constant 0 : index
    %44 = vector.load %arg7[%43, %c0_28, %c0_29] : memref<8x16x128xf32, #tpu.memory_space<vmem>>, vector<1x16x128xf32>
    %45 = vector.shape_cast %44 : vector<1x16x128xf32> to vector<16x128xf32>
    %46 = vector.shape_cast %42 : vector<16x128xf32> to vector<1x16x128xf32>
    tpu.vector_store %arg7[%43, %c0_28, %c0_29], %46 {strides = array<i32>} : memref<8x16x128xf32, #tpu.memory_space<vmem>>, vector<1x16x128xf32>,
    %c3_i32 = arith.constant 3 : i32
    %47 = arith.truncf %42 : vector<16x128xf32> to vector<16x128xbf16>
    %cst_30 = arith.constant dense<0.000000e+00> : vector<16x128xf32>
    %48 = tpu.matmul %47, %12, %cst_30 {dimension_numbers = #tpu.dot_dimension_numbers<[1], [0], [0], [1], [0, 0, 1, 1], [], []>} : vector<16x128xbf16>, vector<128x128xbf16>, vector<16x128xf32> -> vector<16x128xf32>
    %49 = arith.index_cast %c3_i32 : i32 to index
    %c0_31 = arith.constant 0 : index
    %c0_32 = arith.constant 0 : index
    %50 = vector.load %arg9[%49, %c0_31, %c0_32] : memref<8x16x128xf32, #tpu.memory_space<vmem>>, vector<1x16x128xf32>
    %51 = vector.shape_cast %50 : vector<1x16x128xf32> to vector<16x128xf32>
    %52 = arith.addf %51, %48 : vector<16x128xf32>
    %53 = math.tanh %52 : vector<16x128xf32>
    %54 = arith.index_cast %c3_i32 : i32 to index
    %c0_33 = arith.constant 0 : index
    %c0_34 = arith.constant 0 : index
    %55 = vector.load %arg7[%54, %c0_33, %c0_34] : memref<8x16x128xf32, #tpu.memory_space<vmem>>, vector<1x16x128xf32>
    %56 = vector.shape_cast %55 : vector<1x16x128xf32> to vector<16x128xf32>
    %57 = vector.shape_cast %53 : vector<16x128xf32> to vector<1x16x128xf32>
    tpu.vector_store %arg7[%54, %c0_33, %c0_34], %57 {strides = array<i32>} : memref<8x16x128xf32, #tpu.memory_space<vmem>>, vector<1x16x128xf32>,
    %c4_i32 = arith.constant 4 : i32
    %58 = arith.truncf %53 : vector<16x128xf32> to vector<16x128xbf16>
    %cst_35 = arith.constant dense<0.000000e+00> : vector<16x128xf32>
    %59 = tpu.matmul %58, %12, %cst_35 {dimension_numbers = #tpu.dot_dimension_numbers<[1], [0], [0], [1], [0, 0, 1, 1], [], []>} : vector<16x128xbf16>, vector<128x128xbf16>, vector<16x128xf32> -> vector<16x128xf32>
    %60 = arith.index_cast %c4_i32 : i32 to index
    %c0_36 = arith.constant 0 : index
    %c0_37 = arith.constant 0 : index
    %61 = vector.load %arg9[%60, %c0_36, %c0_37] : memref<8x16x128xf32, #tpu.memory_space<vmem>>, vector<1x16x128xf32>
    %62 = vector.shape_cast %61 : vector<1x16x128xf32> to vector<16x128xf32>
    %63 = arith.addf %62, %59 : vector<16x128xf32>
    %64 = math.tanh %63 : vector<16x128xf32>
    %65 = arith.index_cast %c4_i32 : i32 to index
    %c0_38 = arith.constant 0 : index
    %c0_39 = arith.constant 0 : index
    %66 = vector.load %arg7[%65, %c0_38, %c0_39] : memref<8x16x128xf32, #tpu.memory_space<vmem>>, vector<1x16x128xf32>
    %67 = vector.shape_cast %66 : vector<1x16x128xf32> to vector<16x128xf32>
    %68 = vector.shape_cast %64 : vector<16x128xf32> to vector<1x16x128xf32>
    tpu.vector_store %arg7[%65, %c0_38, %c0_39], %68 {strides = array<i32>} : memref<8x16x128xf32, #tpu.memory_space<vmem>>, vector<1x16x128xf32>,
    %c5_i32 = arith.constant 5 : i32
    %69 = arith.truncf %64 : vector<16x128xf32> to vector<16x128xbf16>
    %cst_40 = arith.constant dense<0.000000e+00> : vector<16x128xf32>
    %70 = tpu.matmul %69, %12, %cst_40 {dimension_numbers = #tpu.dot_dimension_numbers<[1], [0], [0], [1], [0, 0, 1, 1], [], []>} : vector<16x128xbf16>, vector<128x128xbf16>, vector<16x128xf32> -> vector<16x128xf32>
    %71 = arith.index_cast %c5_i32 : i32 to index
    %c0_41 = arith.constant 0 : index
    %c0_42 = arith.constant 0 : index
    %72 = vector.load %arg9[%71, %c0_41, %c0_42] : memref<8x16x128xf32, #tpu.memory_space<vmem>>, vector<1x16x128xf32>
    %73 = vector.shape_cast %72 : vector<1x16x128xf32> to vector<16x128xf32>
    %74 = arith.addf %73, %70 : vector<16x128xf32>
    %75 = math.tanh %74 : vector<16x128xf32>
    %76 = arith.index_cast %c5_i32 : i32 to index
    %c0_43 = arith.constant 0 : index
    %c0_44 = arith.constant 0 : index
    %77 = vector.load %arg7[%76, %c0_43, %c0_44] : memref<8x16x128xf32, #tpu.memory_space<vmem>>, vector<1x16x128xf32>
    %78 = vector.shape_cast %77 : vector<1x16x128xf32> to vector<16x128xf32>
    %79 = vector.shape_cast %75 : vector<16x128xf32> to vector<1x16x128xf32>
    tpu.vector_store %arg7[%76, %c0_43, %c0_44], %79 {strides = array<i32>} : memref<8x16x128xf32, #tpu.memory_space<vmem>>, vector<1x16x128xf32>,
    %c6_i32 = arith.constant 6 : i32
    %80 = arith.truncf %75 : vector<16x128xf32> to vector<16x128xbf16>
    %cst_45 = arith.constant dense<0.000000e+00> : vector<16x128xf32>
    %81 = tpu.matmul %80, %12, %cst_45 {dimension_numbers = #tpu.dot_dimension_numbers<[1], [0], [0], [1], [0, 0, 1, 1], [], []>} : vector<16x128xbf16>, vector<128x128xbf16>, vector<16x128xf32> -> vector<16x128xf32>
    %82 = arith.index_cast %c6_i32 : i32 to index
    %c0_46 = arith.constant 0 : index
    %c0_47 = arith.constant 0 : index
    %83 = vector.load %arg9[%82, %c0_46, %c0_47] : memref<8x16x128xf32, #tpu.memory_space<vmem>>, vector<1x16x128xf32>
    %84 = vector.shape_cast %83 : vector<1x16x128xf32> to vector<16x128xf32>
    %85 = arith.addf %84, %81 : vector<16x128xf32>
    %86 = math.tanh %85 : vector<16x128xf32>
    %87 = arith.index_cast %c6_i32 : i32 to index
    %c0_48 = arith.constant 0 : index
    %c0_49 = arith.constant 0 : index
    %88 = vector.load %arg7[%87, %c0_48, %c0_49] : memref<8x16x128xf32, #tpu.memory_space<vmem>>, vector<1x16x128xf32>
    %89 = vector.shape_cast %88 : vector<1x16x128xf32> to vector<16x128xf32>
    %90 = vector.shape_cast %86 : vector<16x128xf32> to vector<1x16x128xf32>
    tpu.vector_store %arg7[%87, %c0_48, %c0_49], %90 {strides = array<i32>} : memref<8x16x128xf32, #tpu.memory_space<vmem>>, vector<1x16x128xf32>,
    %c7_i32 = arith.constant 7 : i32
    %91 = arith.truncf %86 : vector<16x128xf32> to vector<16x128xbf16>
    %cst_50 = arith.constant dense<0.000000e+00> : vector<16x128xf32>
    %92 = tpu.matmul %91, %12, %cst_50 {dimension_numbers = #tpu.dot_dimension_numbers<[1], [0], [0], [1], [0, 0, 1, 1], [], []>} : vector<16x128xbf16>, vector<128x128xbf16>, vector<16x128xf32> -> vector<16x128xf32>
    %93 = arith.index_cast %c7_i32 : i32 to index
    %c0_51 = arith.constant 0 : index
    %c0_52 = arith.constant 0 : index
    %94 = vector.load %arg9[%93, %c0_51, %c0_52] : memref<8x16x128xf32, #tpu.memory_space<vmem>>, vector<1x16x128xf32>
    %95 = vector.shape_cast %94 : vector<1x16x128xf32> to vector<16x128xf32>
    %96 = arith.addf %95, %92 : vector<16x128xf32>
    %97 = math.tanh %96 : vector<16x128xf32>
    %98 = arith.index_cast %c7_i32 : i32 to index
    %c0_53 = arith.constant 0 : index
    %c0_54 = arith.constant 0 : index
    %99 = vector.load %arg7[%98, %c0_53, %c0_54] : memref<8x16x128xf32, #tpu.memory_space<vmem>>, vector<1x16x128xf32>
    %100 = vector.shape_cast %99 : vector<1x16x128xf32> to vector<16x128xf32>
    %101 = vector.shape_cast %97 : vector<16x128xf32> to vector<1x16x128xf32>
    tpu.vector_store %arg7[%98, %c0_53, %c0_54], %101 {strides = array<i32>} : memref<8x16x128xf32, #tpu.memory_space<vmem>>, vector<1x16x128xf32>,
    %c8_i32 = arith.constant 8 : i32
    %c0_55 = arith.constant 0 : index
    %c0_56 = arith.constant 0 : index
    %102 = vector.load %arg8[%c0_55, %c0_56] : memref<16x128xf32, #tpu.memory_space<vmem>>, vector<16x128xf32>
    tpu.vector_store %arg8[%c0_55, %c0_56], %97 {strides = array<i32>} : memref<16x128xf32, #tpu.memory_space<vmem>>, vector<16x128xf32>,
    return
  }
  func.func @transform_0(%arg0: i32, %arg1: i32) -> (i32, i32, i32) {
    %c0_i32 = arith.constant 0 : i32
    %c0_i32_0 = arith.constant 0 : i32
    return %arg1, %arg0, %c0_i32 : i32, i32, i32
  }
  func.func @transform_1(%arg0: i32, %arg1: i32) -> (i32, i32) {
    %c0_i32 = arith.constant 0 : i32
    %c0_i32_0 = arith.constant 0 : i32
    return %arg0, %c0_i32 : i32, i32
  }
  func.func @transform_2(%arg0: i32, %arg1: i32) -> (i32, i32) {
    %c0_i32 = arith.constant 0 : i32
    %c0_i32_0 = arith.constant 0 : i32
    %c0_i32_1 = arith.constant 0 : i32
    return %c0_i32, %c0_i32_0 : i32, i32
  }
  func.func @transform_3(%arg0: i32, %arg1: i32) -> (i32, i32) {
    %c0_i32 = arith.constant 0 : i32
    %c0_i32_0 = arith.constant 0 : i32
    %c0_i32_1 = arith.constant 0 : i32
    return %c0_i32, %c0_i32_0 : i32, i32
  }
  func.func @transform_4(%arg0: i32, %arg1: i32) -> (i32, i32) {
    %c0_i32 = arith.constant 0 : i32
    %c0_i32_0 = arith.constant 0 : i32
    %c0_i32_1 = arith.constant 0 : i32
    return %c0_i32, %c0_i32_0 : i32, i32
  }
  func.func @transform_5(%arg0: i32, %arg1: i32) -> (i32, i32, i32) {
    %c0_i32 = arith.constant 0 : i32
    %c0_i32_0 = arith.constant 0 : i32
    return %arg1, %arg0, %c0_i32 : i32, i32, i32
  }
}

module attributes {stable_mosaic.version = 11 : i64} {
  func.func @_rnn_fused_kernel(%arg0: i32, %arg1: i32, %arg2: memref<8x16x128xbf16, #tpu.memory_space<vmem>>, %arg3: memref<16x128xf32, #tpu.memory_space<vmem>>, %arg4: memref<128x128xbf16, #tpu.memory_space<vmem>>, %arg5: memref<128x128xbf16, #tpu.memory_space<vmem>>, %arg6: memref<1x128xf32, #tpu.memory_space<vmem>>, %arg7: memref<8x16x128xf32, #tpu.memory_space<vmem>>, %arg8: memref<16x128xf32, #tpu.memory_space<vmem>>, %arg9: memref<8x16x128xf32, #tpu.memory_space<vmem>>) attributes {dimension_semantics = [#tpu.dimension_semantics<parallel>, #tpu.dimension_semantics<arbitrary>], iteration_bounds = array<i64: 1, 1>, scalar_prefetch = 0 : i64, scratch_operands = 2 : i64, tpu.core_type = #tpu.core_type<tc>, window_params = [{transform_indices = @transform_0, window_bounds = array<i64: 8, 16, 128>}, {transform_indices = @transform_1, window_bounds = array<i64: 16, 128>}, {pipeline_mode = #tpu.pipeline_mode<synchronous>, transform_indices = @transform_2, window_bounds = array<i64: 128, 128>}, {pipeline_mode = #tpu.pipeline_mode<synchronous>, transform_indices = @transform_3, window_bounds = array<i64: 128, 128>}, {pipeline_mode = #tpu.pipeline_mode<synchronous>, transform_indices = @transform_4, window_bounds = array<i64: 1, 128>}, {transform_indices = @transform_5, window_bounds = array<i64: 8, 16, 128>}]} {
    %c0_i32 = arith.constant 0 : i32
    %0 = arith.cmpi eq, %arg1, %c0_i32 : i32
    %1 = arith.extui %0 : i1 to i32
    %c0_i32_0 = arith.constant 0 : i32
    %2 = arith.cmpi ne, %1, %c0_i32_0 : i32
    scf.if %2 {
      %c0_57 = arith.constant 0 : index
      %c0_58 = arith.constant 0 : index
      %103 = vector.load %arg3[%c0_57, %c0_58] : memref<16x128xf32, #tpu.memory_space<vmem>>, vector<16x128xf32>
      %c0_59 = arith.constant 0 : index
      %c0_60 = arith.constant 0 : index
      %104 = vector.load %arg8[%c0_59, %c0_60] : memref<16x128xf32, #tpu.memory_space<vmem>>, vector<16x128xf32>
      tpu.vector_store %arg8[%c0_59, %c0_60], %103 {strides = array<i32>} : memref<16x128xf32, #tpu.memory_space<vmem>>, vector<16x128xf32>,
    } else {
    }
    %c0 = arith.constant 0 : index
    %c0_1 = arith.constant 0 : index
    %c0_2 = arith.constant 0 : index
    %3 = vector.load %arg2[%c0, %c0_1, %c0_2] : memref<8x16x128xbf16, #tpu.memory_space<vmem>>, vector<8x16x128xbf16>
    %4 = vector.shape_cast %3 : vector<8x16x128xbf16> to vector<128x128xbf16>
    %c0_3 = arith.constant 0 : index
    %c0_4 = arith.constant 0 : index
    %5 = vector.load %arg4[%c0_3, %c0_4] : memref<128x128xbf16, #tpu.memory_space<vmem>>, vector<128x128xbf16>
    %cst = arith.constant dense<0.000000e+00> : vector<128x128xf32>
    %6 = tpu.matmul %4, %5, %cst {dimension_numbers = #tpu.dot_dimension_numbers<[1], [0], [0], [1], [0, 0, 1, 1], [], []>} : vector<128x128xbf16>, vector<128x128xbf16>, vector<128x128xf32> -> vector<128x128xf32>
    %c0_5 = arith.constant 0 : index
    %c0_6 = arith.constant 0 : index
    %7 = vector.load %arg6[%c0_5, %c0_6] : memref<1x128xf32, #tpu.memory_space<vmem>>, vector<1x128xf32>
    %8 = vector.broadcast %7 : vector<1x128xf32> to vector<128x128xf32>
    %9 = arith.addf %6, %8 : vector<128x128xf32>
    %10 = vector.shape_cast %9 : vector<128x128xf32> to vector<8x16x128xf32>
    %c0_7 = arith.constant 0 : index
    %c0_8 = arith.constant 0 : index
    %c0_9 = arith.constant 0 : index
    %11 = vector.load %arg9[%c0_7, %c0_8, %c0_9] : memref<8x16x128xf32, #tpu.memory_space<vmem>>, vector<8x16x128xf32>
    tpu.vector_store %arg9[%c0_7, %c0_8, %c0_9], %10 {strides = array<i32>} : memref<8x16x128xf32, #tpu.memory_space<vmem>>, vector<8x16x128xf32>,
    %c0_10 = arith.constant 0 : index
    %c0_11 = arith.constant 0 : index
    %12 = vector.load %arg5[%c0_10, %c0_11] : memref<128x128xbf16, #tpu.memory_space<vmem>>, vector<128x128xbf16>
    %c0_12 = arith.constant 0 : index
    %c0_13 = arith.constant 0 : index
    %13 = vector.load %arg8[%c0_12, %c0_13] : memref<16x128xf32, #tpu.memory_space<vmem>>, vector<16x128xf32>
    %c0_i32_14 = arith.constant 0 : i32
    %14 = arith.truncf %13 : vector<16x128xf32> to vector<16x128xbf16>
    %cst_15 = arith.constant dense<0.000000e+00> : vector<16x128xf32>
    %15 = tpu.matmul %14, %12, %cst_15 {dimension_numbers = #tpu.dot_dimension_numbers<[1], [0], [0], [1], [0, 0, 1, 1], [], []>} : vector<16x128xbf16>, vector<128x128xbf16>, vector<16x128xf32> -> vector<16x128xf32>
    %16 = arith.index_cast %c0_i32_14 : i32 to index
    %c0_16 = arith.constant 0 : index
    %c0_17 = arith.constant 0 : index
    %17 = vector.load %arg9[%16, %c0_16, %c0_17] : memref<8x16x128xf32, #tpu.memory_space<vmem>>, vector<1x16x128xf32>
    %18 = vector.shape_cast %17 : vector<1x16x128xf32> to vector<16x128xf32>
    %19 = arith.addf %18, %15 : vector<16x128xf32>
    %20 = math.tanh %19 : vector<16x128xf32>
    %21 = arith.index_cast %c0_i32_14 : i32 to index
    %c0_18 = arith.constant 0 : index
    %c0_19 = arith.constant 0 : index
    %22 = vector.load %arg7[%21, %c0_18, %c0_19] : memref<8x16x128xf32, #tpu.memory_space<vmem>>, vector<1x16x128xf32>
    %23 = vector.shape_cast %22 : vector<1x16x128xf32> to vector<16x128xf32>
    %24 = vector.shape_cast %20 : vector<16x128xf32> to vector<1x16x128xf32>
    tpu.vector_store %arg7[%21, %c0_18, %c0_19], %24 {strides = array<i32>} : memref<8x16x128xf32, #tpu.memory_space<vmem>>, vector<1x16x128xf32>,
    %c1_i32 = arith.constant 1 : i32
    %25 = arith.truncf %20 : vector<16x128xf32> to vector<16x128xbf16>
    %cst_20 = arith.constant dense<0.000000e+00> : vector<16x128xf32>
    %26 = tpu.matmul %25, %12, %cst_20 {dimension_numbers = #tpu.dot_dimension_numbers<[1], [0], [0], [1], [0, 0, 1, 1], [], []>} : vector<16x128xbf16>, vector<128x128xbf16>, vector<16x128xf32> -> vector<16x128xf32>
    %27 = arith.index_cast %c1_i32 : i32 to index
    %c0_21 = arith.constant 0 : index
    %c0_22 = arith.constant 0 : index
    %28 = vector.load %arg9[%27, %c0_21, %c0_22] : memref<8x16x128xf32, #tpu.memory_space<vmem>>, vector<1x16x128xf32>
    %29 = vector.shape_cast %28 : vector<1x16x128xf32> to vector<16x128xf32>
    %30 = arith.addf %29, %26 : vector<16x128xf32>
    %31 = math.tanh %30 : vector<16x128xf32>
    %32 = arith.index_cast %c1_i32 : i32 to index
    %c0_23 = arith.constant 0 : index
    %c0_24 = arith.constant 0 : index
    %33 = vector.load %arg7[%32, %c0_23, %c0_24] : memref<8x16x128xf32, #tpu.memory_space<vmem>>, vector<1x16x128xf32>
    %34 = vector.shape_cast %33 : vector<1x16x128xf32> to vector<16x128xf32>
    %35 = vector.shape_cast %31 : vector<16x128xf32> to vector<1x16x128xf32>
    tpu.vector_store %arg7[%32, %c0_23, %c0_24], %35 {strides = array<i32>} : memref<8x16x128xf32, #tpu.memory_space<vmem>>, vector<1x16x128xf32>,
    %c2_i32 = arith.constant 2 : i32
    %36 = arith.truncf %31 : vector<16x128xf32> to vector<16x128xbf16>
    %cst_25 = arith.constant dense<0.000000e+00> : vector<16x128xf32>
    %37 = tpu.matmul %36, %12, %cst_25 {dimension_numbers = #tpu.dot_dimension_numbers<[1], [0], [0], [1], [0, 0, 1, 1], [], []>} : vector<16x128xbf16>, vector<128x128xbf16>, vector<16x128xf32> -> vector<16x128xf32>
    %38 = arith.index_cast %c2_i32 : i32 to index
    %c0_26 = arith.constant 0 : index
    %c0_27 = arith.constant 0 : index
    %39 = vector.load %arg9[%38, %c0_26, %c0_27] : memref<8x16x128xf32, #tpu.memory_space<vmem>>, vector<1x16x128xf32>
    %40 = vector.shape_cast %39 : vector<1x16x128xf32> to vector<16x128xf32>
    %41 = arith.addf %40, %37 : vector<16x128xf32>
    %42 = math.tanh %41 : vector<16x128xf32>
    %43 = arith.index_cast %c2_i32 : i32 to index
    %c0_28 = arith.constant 0 : index
    %c0_29 = arith.constant 0 : index
    %44 = vector.load %arg7[%43, %c0_28, %c0_29] : memref<8x16x128xf32, #tpu.memory_space<vmem>>, vector<1x16x128xf32>
    %45 = vector.shape_cast %44 : vector<1x16x128xf32> to vector<16x128xf32>
    %46 = vector.shape_cast %42 : vector<16x128xf32> to vector<1x16x128xf32>
    tpu.vector_store %arg7[%43, %c0_28, %c0_29], %46 {strides = array<i32>} : memref<8x16x128xf32, #tpu.memory_space<vmem>>, vector<1x16x128xf32>,
    %c3_i32 = arith.constant 3 : i32
    %47 = arith.truncf %42 : vector<16x128xf32> to vector<16x128xbf16>
    %cst_30 = arith.constant dense<0.000000e+00> : vector<16x128xf32>
    %48 = tpu.matmul %47, %12, %cst_30 {dimension_numbers = #tpu.dot_dimension_numbers<[1], [0], [0], [1], [0, 0, 1, 1], [], []>} : vector<16x128xbf16>, vector<128x128xbf16>, vector<16x128xf32> -> vector<16x128xf32>
    %49 = arith.index_cast %c3_i32 : i32 to index
    %c0_31 = arith.constant 0 : index
    %c0_32 = arith.constant 0 : index
    %50 = vector.load %arg9[%49, %c0_31, %c0_32] : memref<8x16x128xf32, #tpu.memory_space<vmem>>, vector<1x16x128xf32>
    %51 = vector.shape_cast %50 : vector<1x16x128xf32> to vector<16x128xf32>
    %52 = arith.addf %51, %48 : vector<16x128xf32>
    %53 = math.tanh %52 : vector<16x128xf32>
    %54 = arith.index_cast %c3_i32 : i32 to index
    %c0_33 = arith.constant 0 : index
    %c0_34 = arith.constant 0 : index
    %55 = vector.load %arg7[%54, %c0_33, %c0_34] : memref<8x16x128xf32, #tpu.memory_space<vmem>>, vector<1x16x128xf32>
    %56 = vector.shape_cast %55 : vector<1x16x128xf32> to vector<16x128xf32>
    %57 = vector.shape_cast %53 : vector<16x128xf32> to vector<1x16x128xf32>
    tpu.vector_store %arg7[%54, %c0_33, %c0_34], %57 {strides = array<i32>} : memref<8x16x128xf32, #tpu.memory_space<vmem>>, vector<1x16x128xf32>,
    %c4_i32 = arith.constant 4 : i32
    %58 = arith.truncf %53 : vector<16x128xf32> to vector<16x128xbf16>
    %cst_35 = arith.constant dense<0.000000e+00> : vector<16x128xf32>
    %59 = tpu.matmul %58, %12, %cst_35 {dimension_numbers = #tpu.dot_dimension_numbers<[1], [0], [0], [1], [0, 0, 1, 1], [], []>} : vector<16x128xbf16>, vector<128x128xbf16>, vector<16x128xf32> -> vector<16x128xf32>
    %60 = arith.index_cast %c4_i32 : i32 to index
    %c0_36 = arith.constant 0 : index
    %c0_37 = arith.constant 0 : index
    %61 = vector.load %arg9[%60, %c0_36, %c0_37] : memref<8x16x128xf32, #tpu.memory_space<vmem>>, vector<1x16x128xf32>
    %62 = vector.shape_cast %61 : vector<1x16x128xf32> to vector<16x128xf32>
    %63 = arith.addf %62, %59 : vector<16x128xf32>
    %64 = math.tanh %63 : vector<16x128xf32>
    %65 = arith.index_cast %c4_i32 : i32 to index
    %c0_38 = arith.constant 0 : index
    %c0_39 = arith.constant 0 : index
    %66 = vector.load %arg7[%65, %c0_38, %c0_39] : memref<8x16x128xf32, #tpu.memory_space<vmem>>, vector<1x16x128xf32>
    %67 = vector.shape_cast %66 : vector<1x16x128xf32> to vector<16x128xf32>
    %68 = vector.shape_cast %64 : vector<16x128xf32> to vector<1x16x128xf32>
    tpu.vector_store %arg7[%65, %c0_38, %c0_39], %68 {strides = array<i32>} : memref<8x16x128xf32, #tpu.memory_space<vmem>>, vector<1x16x128xf32>,
    %c5_i32 = arith.constant 5 : i32
    %69 = arith.truncf %64 : vector<16x128xf32> to vector<16x128xbf16>
    %cst_40 = arith.constant dense<0.000000e+00> : vector<16x128xf32>
    %70 = tpu.matmul %69, %12, %cst_40 {dimension_numbers = #tpu.dot_dimension_numbers<[1], [0], [0], [1], [0, 0, 1, 1], [], []>} : vector<16x128xbf16>, vector<128x128xbf16>, vector<16x128xf32> -> vector<16x128xf32>
    %71 = arith.index_cast %c5_i32 : i32 to index
    %c0_41 = arith.constant 0 : index
    %c0_42 = arith.constant 0 : index
    %72 = vector.load %arg9[%71, %c0_41, %c0_42] : memref<8x16x128xf32, #tpu.memory_space<vmem>>, vector<1x16x128xf32>
    %73 = vector.shape_cast %72 : vector<1x16x128xf32> to vector<16x128xf32>
    %74 = arith.addf %73, %70 : vector<16x128xf32>
    %75 = math.tanh %74 : vector<16x128xf32>
    %76 = arith.index_cast %c5_i32 : i32 to index
    %c0_43 = arith.constant 0 : index
    %c0_44 = arith.constant 0 : index
    %77 = vector.load %arg7[%76, %c0_43, %c0_44] : memref<8x16x128xf32, #tpu.memory_space<vmem>>, vector<1x16x128xf32>
    %78 = vector.shape_cast %77 : vector<1x16x128xf32> to vector<16x128xf32>
    %79 = vector.shape_cast %75 : vector<16x128xf32> to vector<1x16x128xf32>
    tpu.vector_store %arg7[%76, %c0_43, %c0_44], %79 {strides = array<i32>} : memref<8x16x128xf32, #tpu.memory_space<vmem>>, vector<1x16x128xf32>,
    %c6_i32 = arith.constant 6 : i32
    %80 = arith.truncf %75 : vector<16x128xf32> to vector<16x128xbf16>
    %cst_45 = arith.constant dense<0.000000e+00> : vector<16x128xf32>
    %81 = tpu.matmul %80, %12, %cst_45 {dimension_numbers = #tpu.dot_dimension_numbers<[1], [0], [0], [1], [0, 0, 1, 1], [], []>} : vector<16x128xbf16>, vector<128x128xbf16>, vector<16x128xf32> -> vector<16x128xf32>
    %82 = arith.index_cast %c6_i32 : i32 to index
    %c0_46 = arith.constant 0 : index
    %c0_47 = arith.constant 0 : index
    %83 = vector.load %arg9[%82, %c0_46, %c0_47] : memref<8x16x128xf32, #tpu.memory_space<vmem>>, vector<1x16x128xf32>
    %84 = vector.shape_cast %83 : vector<1x16x128xf32> to vector<16x128xf32>
    %85 = arith.addf %84, %81 : vector<16x128xf32>
    %86 = math.tanh %85 : vector<16x128xf32>
    %87 = arith.index_cast %c6_i32 : i32 to index
    %c0_48 = arith.constant 0 : index
    %c0_49 = arith.constant 0 : index
    %88 = vector.load %arg7[%87, %c0_48, %c0_49] : memref<8x16x128xf32, #tpu.memory_space<vmem>>, vector<1x16x128xf32>
    %89 = vector.shape_cast %88 : vector<1x16x128xf32> to vector<16x128xf32>
    %90 = vector.shape_cast %86 : vector<16x128xf32> to vector<1x16x128xf32>
    tpu.vector_store %arg7[%87, %c0_48, %c0_49], %90 {strides = array<i32>} : memref<8x16x128xf32, #tpu.memory_space<vmem>>, vector<1x16x128xf32>,
    %c7_i32 = arith.constant 7 : i32
    %91 = arith.truncf %86 : vector<16x128xf32> to vector<16x128xbf16>
    %cst_50 = arith.constant dense<0.000000e+00> : vector<16x128xf32>
    %92 = tpu.matmul %91, %12, %cst_50 {dimension_numbers = #tpu.dot_dimension_numbers<[1], [0], [0], [1], [0, 0, 1, 1], [], []>} : vector<16x128xbf16>, vector<128x128xbf16>, vector<16x128xf32> -> vector<16x128xf32>
    %93 = arith.index_cast %c7_i32 : i32 to index
    %c0_51 = arith.constant 0 : index
    %c0_52 = arith.constant 0 : index
    %94 = vector.load %arg9[%93, %c0_51, %c0_52] : memref<8x16x128xf32, #tpu.memory_space<vmem>>, vector<1x16x128xf32>
    %95 = vector.shape_cast %94 : vector<1x16x128xf32> to vector<16x128xf32>
    %96 = arith.addf %95, %92 : vector<16x128xf32>
    %97 = math.tanh %96 : vector<16x128xf32>
    %98 = arith.index_cast %c7_i32 : i32 to index
    %c0_53 = arith.constant 0 : index
    %c0_54 = arith.constant 0 : index
    %99 = vector.load %arg7[%98, %c0_53, %c0_54] : memref<8x16x128xf32, #tpu.memory_space<vmem>>, vector<1x16x128xf32>
    %100 = vector.shape_cast %99 : vector<1x16x128xf32> to vector<16x128xf32>
    %101 = vector.shape_cast %97 : vector<16x128xf32> to vector<1x16x128xf32>
    tpu.vector_store %arg7[%98, %c0_53, %c0_54], %101 {strides = array<i32>} : memref<8x16x128xf32, #tpu.memory_space<vmem>>, vector<1x16x128xf32>,
    %c8_i32 = arith.constant 8 : i32
    %c0_55 = arith.constant 0 : index
    %c0_56 = arith.constant 0 : index
    %102 = vector.load %arg8[%c0_55, %c0_56] : memref<16x128xf32, #tpu.memory_space<vmem>>, vector<16x128xf32>
    tpu.vector_store %arg8[%c0_55, %c0_56], %97 {strides = array<i32>} : memref<16x128xf32, #tpu.memory_space<vmem>>, vector<16x128xf32>,
    return
  }
  func.func @transform_0(%arg0: i32, %arg1: i32) -> (i32, i32, i32) {
    %c0_i32 = arith.constant 0 : i32
    %c0_i32_0 = arith.constant 0 : i32
    return %arg1, %arg0, %c0_i32 : i32, i32, i32
  }
  func.func @transform_1(%arg0: i32, %arg1: i32) -> (i32, i32) {
    %c0_i32 = arith.constant 0 : i32
    %c0_i32_0 = arith.constant 0 : i32
    return %arg0, %c0_i32 : i32, i32
  }
  func.func @transform_2(%arg0: i32, %arg1: i32) -> (i32, i32) {
    %c0_i32 = arith.constant 0 : i32
    %c0_i32_0 = arith.constant 0 : i32
    %c0_i32_1 = arith.constant 0 : i32
    return %c0_i32, %c0_i32_0 : i32, i32
  }
  func.func @transform_3(%arg0: i32, %arg1: i32) -> (i32, i32) {
    %c0_i32 = arith.constant 0 : i32
    %c0_i32_0 = arith.constant 0 : i32
    %c0_i32_1 = arith.constant 0 : i32
    return %c0_i32, %c0_i32_0 : i32, i32
  }
  func.func @transform_4(%arg0: i32, %arg1: i32) -> (i32, i32) {
    %c0_i32 = arith.constant 0 : i32
    %c0_i32_0 = arith.constant 0 : i32
    %c0_i32_1 = arith.constant 0 : i32
    return %c0_i32, %c0_i32_0 : i32, i32
  }
  func.func @transform_5(%arg0: i32, %arg1: i32) -> (i32, i32, i32) {
    %c0_i32 = arith.constant 0 : i32
    %c0_i32_0 = arith.constant 0 : i32
    return %arg1, %arg0, %c0_i32 : i32, i32, i32
  }
}

</mosaic_0001>

<llo_original>
// kernel: tpu_custom_call.1
$region0: #{tpu_custom_call.1}
  #allocation0 [shape = 'u32[]', space=smem, size = 0x4, offset = 0x4, fixed_abs, tag = 'smem constant byte address 0x4 - core index']
  #allocation1 [shape = 'u32[72,128]{1,0:T(1,128)}', space=vmem, size = 0x9000, scoped, tag = 'internal scratch']
  #allocation2 [shape = 'f32[16,128]{1,0:T(8,128)}', space=vmem, size = 0x2000, scoped, tag = 'scratch operand']
  #allocation3 [shape = 'f32[8,16,128]{2,1,0:T(8,128)}', space=vmem, size = 0x10000, scoped, tag = 'scratch operand']
  %s0 = inlined_call_operand.hbm [shape: bf16[8,16,128], index: 0, kind: input, shape index: {}]
  %s1 = inlined_call_operand.hbm [shape: f32[16,128], index: 1, kind: input, shape index: {}]
  %s2 = inlined_call_operand.hbm [shape: bf16[128,128], index: 2, kind: input, shape index: {}]
  %s3 = inlined_call_operand.hbm [shape: bf16[128,128], index: 3, kind: input, shape index: {}]
  %s4 = inlined_call_operand.vmem [shape: f32[1,128], index: 4, kind: input, shape index: {}]
  %s5 = inlined_call_operand.hbm [shape: f32[8,16,128], index: 5, kind: output, shape index: {}]
  %s6 = sld [smem:[#allocation0]]
  $region50: #{tpu_custom_call.1} parent=0
    _
  %s8 = ssub.s32 1, %s6
  %s9 = scalar_select 0, %s8, %s6
  $region1: #{tpu_custom_call.1} parent=0
    #allocation4 [shape = 'u8[32768]{0}', space=vmem, size = 0x8000, scoped, tag = 'input window, operand 0, single buffered']
    #allocation5 [shape = 's32[1]{0}', space=sflag, size = 0x4, scoped, tag = 'scoped memory for tpu_custom_call.1']
    #allocation6 [shape = 's32[1]{0}', space=sflag, size = 0x4, scoped, tag = 'scoped memory for tpu_custom_call.1']
    #allocation7 [shape = 'u8[8192]{0}', space=vmem, size = 0x2000, scoped, tag = 'input window, operand 1, single buffered']
    #allocation8 [shape = 's32[1]{0}', space=sflag, size = 0x4, scoped, tag = 'scoped memory for tpu_custom_call.1']
    #allocation9 [shape = 'u8[32768]{0}', space=vmem, size = 0x8000, scoped, tag = 'input window, operand 2, single buffered']
    #allocation10 [shape = 'u8[32768]{0}', space=vmem, size = 0x8000, scoped, tag = 'input window, operand 3, single buffered']
    #allocation11 [shape = 's32[1]{0}', space=sflag, size = 0x4, scoped, tag = 'scoped memory for tpu_custom_call.1']
    #allocation12 [shape = 'u8[65536]{0}', space=vmem, size = 0x10000, scoped, tag = 'output window, operand 0, single buffered']
    %10 = vsyncpa [#allocation5], 0
    %11 = vsyncpa [#allocation8], 0
    %12 = vsyncpa [#allocation11], 0
    %13 = vsyncpa [#allocation6], 0
    // Predicated region
    $region2: #{tpu_custom_call.1} parent=1 // pred_check
      _
    $region3: #{tpu_custom_call.1} parent=1 // pred_check_branch
      %15 = sbr.rel (0) target = $region5
    $region4: #{tpu_custom_call.1} parent=1 // pred_region
      %17 = vsyncadd [#allocation5], 0
      %s18 = sshll.u32 %s0, 4
      %s19 = int_to_ptr.hbm [resolvable:$true] %s18
      %s20 = sshll.u32 [#allocation4], 4
      %s21 = int_to_ptr.vmem [resolvable:$true] %s20
      %26 = dma.hbm_to_vmem [thread:$0]  %s19, 1024, %s21, [#allocation5], 64, 64, 4
    $region5: #{tpu_custom_call.1} parent=1 // pred_fallthru
      _
    // Predicated region
    $region6: #{tpu_custom_call.1} parent=1 // pred_check
      _
    $region7: #{tpu_custom_call.1} parent=1 // pred_check_branch
      %28 = sbr.rel (0) target = $region9
    $region8: #{tpu_custom_call.1} parent=1 // pred_region
      %30 = vsyncadd [#allocation8], 0
      %s31 = sshll.u32 %s1, 4
      %s32 = int_to_ptr.hbm [resolvable:$true] %s31
      %s33 = sshll.u32 [#allocation7], 4
      %s34 = int_to_ptr.vmem [resolvable:$true] %s33
      %39 = dma.hbm_to_vmem [thread:$0]  %s32, 256, %s34, [#allocation8], 128, 128, 8
    $region9: #{tpu_custom_call.1} parent=1 // pred_fallthru
      _
    // Predicated region
    $region10: #{tpu_custom_call.1} parent=1 // pred_check
      _
    $region11: #{tpu_custom_call.1} parent=1 // pred_check_branch
      %41 = sbr.rel (0) target = $region13
    $region12: #{tpu_custom_call.1} parent=1 // pred_region
      %43 = vsyncadd [#allocation8], 0
      %s44 = sshll.u32 %s2, 4
      %s45 = int_to_ptr.hbm [resolvable:$true] %s44
      %s46 = sshll.u32 [#allocation9], 4
      %s47 = int_to_ptr.vmem [resolvable:$true] %s46
      %52 = dma.hbm_to_vmem [thread:$0]  %s45, 1024, %s47, [#allocation8], 64, 64, 4
    $region13: #{tpu_custom_call.1} parent=1 // pred_fallthru
      _
    // Predicated region
    $region14: #{tpu_custom_call.1} parent=1 // pred_check
      _
    $region15: #{tpu_custom_call.1} parent=1 // pred_check_branch
      %54 = sbr.rel (0) target = $region17
    $region16: #{tpu_custom_call.1} parent=1 // pred_region
      %56 = vsyncadd [#allocation11], 0
      %s57 = sshll.u32 %s3, 4
      %s58 = int_to_ptr.hbm [resolvable:$true] %s57
      %s59 = sshll.u32 [#allocation10], 4
      %s60 = int_to_ptr.vmem [resolvable:$true] %s59
      %65 = dma.hbm_to_vmem [thread:$0]  %s58, 1024, %s60, [#allocation11], 64, 64, 4
    $region17: #{tpu_custom_call.1} parent=1 // pred_fallthru
      _
    // Predicated region
    $region18: #{tpu_custom_call.1} parent=1 // pred_check
      _
    $region19: #{tpu_custom_call.1} parent=1 // pred_check_branch
      %67 = sbr.rel (0) target = $region21
    $region20: #{tpu_custom_call.1} parent=1 // pred_region
      _
    $region21: #{tpu_custom_call.1} parent=1 // pred_fallthru
      _
    // Predicated region
    $region22: #{tpu_custom_call.1} parent=1 // pred_check
      _
    $region23: #{tpu_custom_call.1} parent=1 // pred_check_branch
      %69 = sbr.rel (0) target = $region25
    $region24: #{tpu_custom_call.1} parent=1 // pred_region
      %71 = dma.done [#allocation5], 1024
    $region25: #{tpu_custom_call.1} parent=1 // pred_fallthru
      _
    // Predicated region
    $region26: #{tpu_custom_call.1} parent=1 // pred_check
      _
    $region27: #{tpu_custom_call.1} parent=1 // pred_check_branch
      %73 = sbr.rel (0) target = $region29
    $region28: #{tpu_custom_call.1} parent=1 // pred_region
      %75 = dma.done [#allocation8], 256
    $region29: #{tpu_custom_call.1} parent=1 // pred_fallthru
      _
    // Predicated region
    $region30: #{tpu_custom_call.1} parent=1 // pred_check
      _
    $region31: #{tpu_custom_call.1} parent=1 // pred_check_branch
      %77 = sbr.rel (0) target = $region33
    $region32: #{tpu_custom_call.1} parent=1 // pred_region
      %79 = dma.done [#allocation8], 1024
    $region33: #{tpu_custom_call.1} parent=1 // pred_fallthru
      _
    // Predicated region
    $region34: #{tpu_custom_call.1} parent=1 // pred_check
      _
    $region35: #{tpu_custom_call.1} parent=1 // pred_check_branch
      %81 = sbr.rel (0) target = $region37
    $region36: #{tpu_custom_call.1} parent=1 // pred_region
      %83 = dma.done [#allocation11], 1024
    $region37: #{tpu_custom_call.1} parent=1 // pred_fallthru
      _
    %p84 = scmp.eq.s32.totalorder 0, 0
    // Predicated region
    $region38: #{tpu_custom_call.1} parent=1 // pred_check
      %p85 = pneg %p84
    $region39: #{tpu_custom_call.1} parent=1 // pred_check_branch
      %87 = sbr.rel (%p85) target = $region41
    $region40: #{tpu_custom_call.1} parent=1 // pred_region
      %v88 = vld [vmem:[#allocation7] sm:$0xff]
      %v89 = vld [vmem:[#allocation7 + $0x8] sm:$0xff]
      %90 = vst [vmem:[#allocation2] sm:$0xff] %v88
      %91 = vst [vmem:[#allocation2 + $0x8] sm:$0xff] %v89
    $region41: #{tpu_custom_call.1} parent=1 // pred_fallthru
      _
    %v92 = vld [vmem:[#allocation4] sm:$0xf]
    %v93 = vld [vmem:[#allocation4 + $0x4] sm:$0xf]
    %v94 = vld [vmem:[#allocation4 + $0x8] sm:$0xf]
    %v95 = vld [vmem:[#allocation4 + $0xc] sm:$0xf]
    %v96 = vld [vmem:[#allocation4 + $0x10] sm:$0xf]
    %v97 = vld [vmem:[#allocation4 + $0x14] sm:$0xf]
    %v98 = vld [vmem:[#allocation4 + $0x18] sm:$0xf]
    %v99 = vld [vmem:[#allocation4 + $0x1c] sm:$0xf]
    %v100 = vld [vmem:[#allocation4 + $0x20] sm:$0xf]
    %v101 = vld [vmem:[#allocation4 + $0x24] sm:$0xf]
    %v102 = vld [vmem:[#allocation4 + $0x28] sm:$0xf]
    %v103 = vld [vmem:[#allocation4 + $0x2c] sm:$0xf]
    %v104 = vld [vmem:[#allocation4 + $0x30] sm:$0xf]
    %v105 = vld [vmem:[#allocation4 + $0x34] sm:$0xf]
    %v106 = vld [vmem:[#allocation4 + $0x38] sm:$0xf]
    %v107 = vld [vmem:[#allocation4 + $0x3c] sm:$0xf]
    %v108 = vld [vmem:[#allocation9] sm:$0xf]
    %v109 = vld [vmem:[#allocation9 + $0x4] sm:$0xf]
    %v110 = vld [vmem:[#allocation9 + $0x8] sm:$0xf]
    %v111 = vld [vmem:[#allocation9 + $0xc] sm:$0xf]
    %v112 = vld [vmem:[#allocation9 + $0x10] sm:$0xf]
    %v113 = vld [vmem:[#allocation9 + $0x14] sm:$0xf]
    %v114 = vld [vmem:[#allocation9 + $0x18] sm:$0xf]
    %v115 = vld [vmem:[#allocation9 + $0x1c] sm:$0xf]
    %v116 = vld [vmem:[#allocation9 + $0x20] sm:$0xf]
    %v117 = vld [vmem:[#allocation9 + $0x24] sm:$0xf]
    %v118 = vld [vmem:[#allocation9 + $0x28] sm:$0xf]
    %v119 = vld [vmem:[#allocation9 + $0x2c] sm:$0xf]
    %v120 = vld [vmem:[#allocation9 + $0x30] sm:$0xf]
    %v121 = vld [vmem:[#allocation9 + $0x34] sm:$0xf]
    %v122 = vld [vmem:[#allocation9 + $0x38] sm:$0xf]
    %v123 = vld [vmem:[#allocation9 + $0x3c] sm:$0xf]
    %v124 = vld [vmem:[%s4] sm:$0x1]
    %v126 = vperm.slane %v124, 0
    %v144 = vunpack.c.l.b16 %v92
    %v145 = vunpack.c.l.b16 %v93
    %v146 = vunpack.c.l.b16 %v94
    %v147 = vunpack.c.l.b16 %v95
    %v148 = vunpack.c.l.b16 %v96
    %v149 = vunpack.c.l.b16 %v97
    %v150 = vunpack.c.l.b16 %v98
    %v151 = vunpack.c.l.b16 %v99
    %v152 = vunpack.c.l.b16 %v100
    %v153 = vunpack.c.l.b16 %v101
    %v154 = vunpack.c.l.b16 %v102
    %v155 = vunpack.c.l.b16 %v103
    %v156 = vunpack.c.l.b16 %v104
    %v157 = vunpack.c.l.b16 %v105
    %v158 = vunpack.c.l.b16 %v106
    %v159 = vunpack.c.l.b16 %v107
    %v160 = vpack.c.b16 %v145, %v144
    %v161 = vpack.c.b16 %v147, %v146
    %v162 = vpack.c.b16 %v149, %v148
    %v163 = vpack.c.b16 %v151, %v150
    %v164 = vpack.c.b16 %v153, %v152
    %v165 = vpack.c.b16 %v155, %v154
    %v166 = vpack.c.b16 %v157, %v156
    %v167 = vpack.c.b16 %v159, %v158
    %v192 = vunpack.c.l.b16 %v108
    %v193 = vunpack.c.l.b16 %v109
    %v194 = vunpack.c.l.b16 %v110
    %v195 = vunpack.c.l.b16 %v111
    %v196 = vunpack.c.l.b16 %v112
    %v197 = vunpack.c.l.b16 %v113
    %v198 = vunpack.c.l.b16 %v114
    %v199 = vunpack.c.l.b16 %v115
    %v200 = vunpack.c.l.b16 %v116
    %v201 = vunpack.c.l.b16 %v117
    %v202 = vunpack.c.l.b16 %v118
    %v203 = vunpack.c.l.b16 %v119
    %v204 = vunpack.c.l.b16 %v120
    %v205 = vunpack.c.l.b16 %v121
    %v206 = vunpack.c.l.b16 %v122
    %v207 = vunpack.c.l.b16 %v123
    %v208 = vpack.c.b16 %v193, %v192
    %v209 = vpack.c.b16 %v195, %v194
    %v210 = vpack.c.b16 %v197, %v196
    %v211 = vpack.c.b16 %v199, %v198
    %v212 = vpack.c.b16 %v201, %v200
    %v213 = vpack.c.b16 %v203, %v202
    %v214 = vpack.c.b16 %v205, %v204
    %v215 = vpack.c.b16 %v207, %v206
    %224 = vmatpush.bf16.msra.mxu0 %v215
    %225 = vmatpush.bf16.msra.mxu0 %v214
    %226 = vmatpush.bf16.msra.mxu0 %v213
    %227 = vmatpush.bf16.msra.mxu0 %v212
    %228 = vmatpush.bf16.msra.mxu0 %v211
    %229 = vmatpush.bf16.msra.mxu0 %v210
    %230 = vmatpush.bf16.msra.mxu0 %v209
    %231 = vmatpush.bf16.msra.mxu0 %v208
    %232 = vmatmul.bf16.gmra.mxu0 %v160
    %v233 = vpop.f32.mrf.mxu0
    %v234 = vadd.f32 %v126, %v233
    %v235 = vpop.f32.mrf.mxu0
    %v236 = vadd.f32 %v126, %v235
    %237 = vmatmul.bf16.gmra.mxu0 %v161
    %v238 = vpop.f32.mrf.mxu0
    %v239 = vadd.f32 %v126, %v238
    %v240 = vpop.f32.mrf.mxu0
    %v241 = vadd.f32 %v126, %v240
    %242 = vmatmul.bf16.gmra.mxu0 %v162
    %v243 = vpop.f32.mrf.mxu0
    %v244 = vadd.f32 %v126, %v243
    %v245 = vpop.f32.mrf.mxu0
    %v246 = vadd.f32 %v126, %v245
    %247 = vmatmul.bf16.gmra.mxu0 %v163
    %v248 = vpop.f32.mrf.mxu0
    %v249 = vadd.f32 %v126, %v248
    %v250 = vpop.f32.mrf.mxu0
    %v251 = vadd.f32 %v126, %v250
    %252 = vmatmul.bf16.gmra.mxu0 %v164
    %v253 = vpop.f32.mrf.mxu0
    %v254 = vadd.f32 %v126, %v253
    %v255 = vpop.f32.mrf.mxu0
    %v256 = vadd.f32 %v126, %v255
    %257 = vmatmul.bf16.gmra.mxu0 %v165
    %v258 = vpop.f32.mrf.mxu0
    %v259 = vadd.f32 %v126, %v258
    %v260 = vpop.f32.mrf.mxu0
    %v261 = vadd.f32 %v126, %v260
    %262 = vmatmul.bf16.gmra.mxu0 %v166
    %v263 = vpop.f32.mrf.mxu0
    %v264 = vadd.f32 %v126, %v263
    %v265 = vpop.f32.mrf.mxu0
    %v266 = vadd.f32 %v126, %v265
    %267 = vmatmul.bf16.gmra.mxu0 %v167
    %v268 = vpop.f32.mrf.mxu0
    %v269 = vadd.f32 %v126, %v268
    %v270 = vpop.f32.mrf.mxu0
    %v271 = vadd.f32 %v126, %v270
    %272 = vdwg.mxu0
    %273 = vst [vmem:[#allocation3] sm:$0xff] %v234
    %274 = vst [vmem:[#allocation3 + $0x8] sm:$0xff] %v236
    %275 = vst [vmem:[#allocation3 + $0x10] sm:$0xff] %v239
    %276 = vst [vmem:[#allocation3 + $0x18] sm:$0xff] %v241
    %277 = vst [vmem:[#allocation3 + $0x20] sm:$0xff] %v244
    %278 = vst [vmem:[#allocation3 + $0x28] sm:$0xff] %v246
    %279 = vst [vmem:[#allocation3 + $0x30] sm:$0xff] %v249
    %280 = vst [vmem:[#allocation3 + $0x38] sm:$0xff] %v251
    %281 = vst [vmem:[#allocation3 + $0x40] sm:$0xff] %v254
    %282 = vst [vmem:[#allocation3 + $0x48] sm:$0xff] %v256
    %283 = vst [vmem:[#allocation3 + $0x50] sm:$0xff] %v259
    %284 = vst [vmem:[#allocation3 + $0x58] sm:$0xff] %v261
    %285 = vst [vmem:[#allocation3 + $0x60] sm:$0xff] %v264
    %286 = vst [vmem:[#allocation3 + $0x68] sm:$0xff] %v266
    %287 = vst [vmem:[#allocation3 + $0x70] sm:$0xff] %v269
    %288 = vst [vmem:[#allocation3 + $0x78] sm:$0xff] %v271
    %v289 = vld [vmem:[#allocation10] sm:$0xf]
    %v290 = vld [vmem:[#allocation10 + $0x4] sm:$0xf]
    %v291 = vld [vmem:[#allocation10 + $0x8] sm:$0xf]
    %v292 = vld [vmem:[#allocation10 + $0xc] sm:$0xf]
    %v293 = vld [vmem:[#allocation10 + $0x10] sm:$0xf]
    %v294 = vld [vmem:[#allocation10 + $0x14] sm:$0xf]
    %v295 = vld [vmem:[#allocation10 + $0x18] sm:$0xf]
    %v296 = vld [vmem:[#allocation10 + $0x1c] sm:$0xf]
    %v297 = vld [vmem:[#allocation10 + $0x20] sm:$0xf]
    %v298 = vld [vmem:[#allocation10 + $0x24] sm:$0xf]
    %v299 = vld [vmem:[#allocation10 + $0x28] sm:$0xf]
    %v300 = vld [vmem:[#allocation10 + $0x2c] sm:$0xf]
    %v301 = vld [vmem:[#allocation10 + $0x30] sm:$0xf]
    %v302 = vld [vmem:[#allocation10 + $0x34] sm:$0xf]
    %v303 = vld [vmem:[#allocation10 + $0x38] sm:$0xf]
    %v304 = vld [vmem:[#allocation10 + $0x3c] sm:$0xf]
    %v305 = vld [vmem:[#allocation2] sm:$0xff]
    %v306 = vld [vmem:[#allocation2 + $0x8] sm:$0xff]
    %v307 = vpack.c.bf16 %v306, %v305
    %v324 = vunpack.c.l.b16 %v289
    %v325 = vunpack.c.l.b16 %v290
    %v326 = vunpack.c.l.b16 %v291
    %v327 = vunpack.c.l.b16 %v292
    %v328 = vunpack.c.l.b16 %v293
    %v329 = vunpack.c.l.b16 %v294
    %v330 = vunpack.c.l.b16 %v295
    %v331 = vunpack.c.l.b16 %v296
    %v332 = vunpack.c.l.b16 %v297
    %v333 = vunpack.c.l.b16 %v298
    %v334 = vunpack.c.l.b16 %v299
    %v335 = vunpack.c.l.b16 %v300
    %v336 = vunpack.c.l.b16 %v301
    %v337 = vunpack.c.l.b16 %v302
    %v338 = vunpack.c.l.b16 %v303
    %v339 = vunpack.c.l.b16 %v304
    %v340 = vpack.c.b16 %v325, %v324
    %v341 = vpack.c.b16 %v327, %v326
    %v342 = vpack.c.b16 %v329, %v328
    %v343 = vpack.c.b16 %v331, %v330
    %v344 = vpack.c.b16 %v333, %v332
    %v345 = vpack.c.b16 %v335, %v334
    %v346 = vpack.c.b16 %v337, %v336
    %v347 = vpack.c.b16 %v339, %v338
    %356 = vmatpush.bf16.msra.mxu0 %v347
    %357 = vmatpush.bf16.msra.mxu0 %v346
    %358 = vmatpush.bf16.msra.mxu0 %v345
    %359 = vmatpush.bf16.msra.mxu0 %v344
    %360 = vmatpush.bf16.msra.mxu0 %v343
    %361 = vmatpush.bf16.msra.mxu0 %v342
    %362 = vmatpush.bf16.msra.mxu0 %v341
    %363 = vmatpush.bf16.msra.mxu0 %v340
    %364 = vmatmul.bf16.gmra.mxu0 %v307
    %v365 = vpop.f32.mrf.mxu0
    %v366 = vadd.f32 0.0, %v365
    %v367 = vpop.f32.mrf.mxu0
    %v368 = vadd.f32 0.0, %v367
    %369 = vdwg.mxu0
    %v370 = vld [vmem:[#allocation3] sm:$0xff]
    %v371 = vld [vmem:[#allocation3 + $0x8] sm:$0xff]
    %v372 = vadd.f32 %v370, %v366
    %v373 = vadd.f32 %v371, %v368
    %v374 = vtanh.pop %v372
    %v375 = vtanh.pop %v373
    %376 = vst [vmem:[#allocation12] sm:$0xff] %v374
    %377 = vst [vmem:[#allocation12 + $0x8] sm:$0xff] %v375
    %v378 = vpack.c.bf16 %v375, %v374
    %379 = vmatpush.bf16.msra.mxu0 %v347
    %380 = vmatpush.bf16.msra.mxu0 %v346
    %381 = vmatpush.bf16.msra.mxu0 %v345
    %382 = vmatpush.bf16.msra.mxu0 %v344
    %383 = vmatpush.bf16.msra.mxu0 %v343
    %384 = vmatpush.bf16.msra.mxu0 %v342
    %385 = vmatpush.bf16.msra.mxu0 %v341
    %386 = vmatpush.bf16.msra.mxu0 %v340
    %387 = vmatmul.bf16.gmra.mxu0 %v378
    %v388 = vpop.f32.mrf.mxu0
    %v389 = vadd.f32 0.0, %v388
    %v390 = vpop.f32.mrf.mxu0
    %v391 = vadd.f32 0.0, %v390
    %392 = vdwg.mxu0
    %s393 = scalar_lea.vmem [#allocation3], 16
    %v394 = vld [vmem:[%s393] sm:$0xff]
    %v395 = vld [vmem:[%s393 + $0x8] sm:$0xff]
    %v396 = vadd.f32 %v394, %v389
    %v397 = vadd.f32 %v395, %v391
    %v398 = vtanh.pop %v396
    %v399 = vtanh.pop %v397
    %s400 = scalar_lea.vmem [#allocation12], 16
    %401 = vst [vmem:[%s400] sm:$0xff] %v398
    %402 = vst [vmem:[%s400 + $0x8] sm:$0xff] %v399
    %v403 = vpack.c.bf16 %v399, %v398
    %404 = vmatpush.bf16.msra.mxu0 %v347
    %405 = vmatpush.bf16.msra.mxu0 %v346
    %406 = vmatpush.bf16.msra.mxu0 %v345
    %407 = vmatpush.bf16.msra.mxu0 %v344
    %408 = vmatpush.bf16.msra.mxu0 %v343
    %409 = vmatpush.bf16.msra.mxu0 %v342
    %410 = vmatpush.bf16.msra.mxu0 %v341
    %411 = vmatpush.bf16.msra.mxu0 %v340
    %412 = vmatmul.bf16.gmra.mxu0 %v403
    %v413 = vpop.f32.mrf.mxu0
    %v414 = vadd.f32 0.0, %v413
    %v415 = vpop.f32.mrf.mxu0
    %v416 = vadd.f32 0.0, %v415
    %417 = vdwg.mxu0
    %s418 = scalar_lea.vmem [#allocation3], 32
    %v419 = vld [vmem:[%s418] sm:$0xff]
    %v420 = vld [vmem:[%s418 + $0x8] sm:$0xff]
    %v421 = vadd.f32 %v419, %v414
    %v422 = vadd.f32 %v420, %v416
    %v423 = vtanh.pop %v421
    %v424 = vtanh.pop %v422
    %s425 = scalar_lea.vmem [#allocation12], 32
    %426 = vst [vmem:[%s425] sm:$0xff] %v423
    %427 = vst [vmem:[%s425 + $0x8] sm:$0xff] %v424
    %v428 = vpack.c.bf16 %v424, %v423
    %429 = vmatpush.bf16.msra.mxu0 %v347
    %430 = vmatpush.bf16.msra.mxu0 %v346
    %431 = vmatpush.bf16.msra.mxu0 %v345
    %432 = vmatpush.bf16.msra.mxu0 %v344
    %433 = vmatpush.bf16.msra.mxu0 %v343
    %434 = vmatpush.bf16.msra.mxu0 %v342
    %435 = vmatpush.bf16.msra.mxu0 %v341
    %436 = vmatpush.bf16.msra.mxu0 %v340
    %437 = vmatmul.bf16.gmra.mxu0 %v428
    %v438 = vpop.f32.mrf.mxu0
    %v439 = vadd.f32 0.0, %v438
    %v440 = vpop.f32.mrf.mxu0
    %v441 = vadd.f32 0.0, %v440
    %442 = vdwg.mxu0
    %s443 = scalar_lea.vmem [#allocation3], 48
    %v444 = vld [vmem:[%s443] sm:$0xff]
    %v445 = vld [vmem:[%s443 + $0x8] sm:$0xff]
    %v446 = vadd.f32 %v444, %v439
    %v447 = vadd.f32 %v445, %v441
    %v448 = vtanh.pop %v446
    %v449 = vtanh.pop %v447
    %s450 = scalar_lea.vmem [#allocation12], 48
    %451 = vst [vmem:[%s450] sm:$0xff] %v448
    %452 = vst [vmem:[%s450 + $0x8] sm:$0xff] %v449
    %v453 = vpack.c.bf16 %v449, %v448
    %454 = vmatpush.bf16.msra.mxu0 %v347
    %455 = vmatpush.bf16.msra.mxu0 %v346
    %456 = vmatpush.bf16.msra.mxu0 %v345
    %457 = vmatpush.bf16.msra.mxu0 %v344
    %458 = vmatpush.bf16.msra.mxu0 %v343
    %459 = vmatpush.bf16.msra.mxu0 %v342
    %460 = vmatpush.bf16.msra.mxu0 %v341
    %461 = vmatpush.bf16.msra.mxu0 %v340
    %462 = vmatmul.bf16.gmra.mxu0 %v453
    %v463 = vpop.f32.mrf.mxu0
    %v464 = vadd.f32 0.0, %v463
    %v465 = vpop.f32.mrf.mxu0
    %v466 = vadd.f32 0.0, %v465
    %467 = vdwg.mxu0
    %s468 = scalar_lea.vmem [#allocation3], 64
    %v469 = vld [vmem:[%s468] sm:$0xff]
    %v470 = vld [vmem:[%s468 + $0x8] sm:$0xff]
    %v471 = vadd.f32 %v469, %v464
    %v472 = vadd.f32 %v470, %v466
    %v473 = vtanh.pop %v471
    %v474 = vtanh.pop %v472
    %s475 = scalar_lea.vmem [#allocation12], 64
    %476 = vst [vmem:[%s475] sm:$0xff] %v473
    %477 = vst [vmem:[%s475 + $0x8] sm:$0xff] %v474
    %v478 = vpack.c.bf16 %v474, %v473
    %479 = vmatpush.bf16.msra.mxu0 %v347
    %480 = vmatpush.bf16.msra.mxu0 %v346
    %481 = vmatpush.bf16.msra.mxu0 %v345
    %482 = vmatpush.bf16.msra.mxu0 %v344
    %483 = vmatpush.bf16.msra.mxu0 %v343
    %484 = vmatpush.bf16.msra.mxu0 %v342
    %485 = vmatpush.bf16.msra.mxu0 %v341
    %486 = vmatpush.bf16.msra.mxu0 %v340
    %487 = vmatmul.bf16.gmra.mxu0 %v478
    %v488 = vpop.f32.mrf.mxu0
    %v489 = vadd.f32 0.0, %v488
    %v490 = vpop.f32.mrf.mxu0
    %v491 = vadd.f32 0.0, %v490
    %492 = vdwg.mxu0
    %s493 = scalar_lea.vmem [#allocation3], 80
    %v494 = vld [vmem:[%s493] sm:$0xff]
    %v495 = vld [vmem:[%s493 + $0x8] sm:$0xff]
    %v496 = vadd.f32 %v494, %v489
    %v497 = vadd.f32 %v495, %v491
    %v498 = vtanh.pop %v496
    %v499 = vtanh.pop %v497
    %s500 = scalar_lea.vmem [#allocation12], 80
    %501 = vst [vmem:[%s500] sm:$0xff] %v498
    %502 = vst [vmem:[%s500 + $0x8] sm:$0xff] %v499
    %v503 = vpack.c.bf16 %v499, %v498
    %504 = vmatpush.bf16.msra.mxu0 %v347
    %505 = vmatpush.bf16.msra.mxu0 %v346
    %506 = vmatpush.bf16.msra.mxu0 %v345
    %507 = vmatpush.bf16.msra.mxu0 %v344
    %508 = vmatpush.bf16.msra.mxu0 %v343
    %509 = vmatpush.bf16.msra.mxu0 %v342
    %510 = vmatpush.bf16.msra.mxu0 %v341
    %511 = vmatpush.bf16.msra.mxu0 %v340
    %512 = vmatmul.bf16.gmra.mxu0 %v503
    %v513 = vpop.f32.mrf.mxu0
    %v514 = vadd.f32 0.0, %v513
    %v515 = vpop.f32.mrf.mxu0
    %v516 = vadd.f32 0.0, %v515
    %517 = vdwg.mxu0
    %s518 = scalar_lea.vmem [#allocation3], 96
    %v519 = vld [vmem:[%s518] sm:$0xff]
    %v520 = vld [vmem:[%s518 + $0x8] sm:$0xff]
    %v521 = vadd.f32 %v519, %v514
    %v522 = vadd.f32 %v520, %v516
    %v523 = vtanh.pop %v521
    %v524 = vtanh.pop %v522
    %s525 = scalar_lea.vmem [#allocation12], 96
    %526 = vst [vmem:[%s525] sm:$0xff] %v523
    %527 = vst [vmem:[%s525 + $0x8] sm:$0xff] %v524
    %v528 = vpack.c.bf16 %v524, %v523
    %529 = vmatpush.bf16.msra.mxu0 %v347
    %530 = vmatpush.bf16.msra.mxu0 %v346
    %531 = vmatpush.bf16.msra.mxu0 %v345
    %532 = vmatpush.bf16.msra.mxu0 %v344
    %533 = vmatpush.bf16.msra.mxu0 %v343
    %534 = vmatpush.bf16.msra.mxu0 %v342
    %535 = vmatpush.bf16.msra.mxu0 %v341
    %536 = vmatpush.bf16.msra.mxu0 %v340
    %537 = vmatmul.bf16.gmra.mxu0 %v528
    %v538 = vpop.f32.mrf.mxu0
    %v539 = vadd.f32 0.0, %v538
    %v540 = vpop.f32.mrf.mxu0
    %v541 = vadd.f32 0.0, %v540
    %542 = vdwg.mxu0
    %s543 = scalar_lea.vmem [#allocation3], 112
    %v544 = vld [vmem:[%s543] sm:$0xff]
    %v545 = vld [vmem:[%s543 + $0x8] sm:$0xff]
    %v546 = vadd.f32 %v544, %v539
    %v547 = vadd.f32 %v545, %v541
    %v548 = vtanh.pop %v546
    %v549 = vtanh.pop %v547
    %s550 = scalar_lea.vmem [#allocation12], 112
    %551 = vst [vmem:[%s550] sm:$0xff] %v548
    %552 = vst [vmem:[%s550 + $0x8] sm:$0xff] %v549
    %553 = vst [vmem:[#allocation2] sm:$0xff] %v548
    %554 = vst [vmem:[#allocation2 + $0x8] sm:$0xff] %v549
    // Predicated region
    $region42: #{tpu_custom_call.1} parent=1 // pred_check
      _
    $region43: #{tpu_custom_call.1} parent=1 // pred_check_branch
      %556 = sbr.rel (0) target = $region45
    $region44: #{tpu_custom_call.1} parent=1 // pred_region
      %558 = vsyncadd [#allocation6], 0
      %s559 = sshll.u32 [#allocation12], 4
      %s560 = int_to_ptr.vmem [resolvable:$true] %s559
      %s561 = sshll.u32 %s5, 4
      %s562 = int_to_ptr.hbm [resolvable:$true] %s561
      %567 = dma.vmem_to_hbm [thread:$0]  %s560, 2048, %s562, [#allocation6], 128, 128, 8
    $region45: #{tpu_custom_call.1} parent=1 // pred_fallthru
      _
    // Predicated region
    $region46: #{tpu_custom_call.1} parent=1 // pred_check
      _
    $region47: #{tpu_custom_call.1} parent=1 // pred_check_branch
      %569 = sbr.rel (0) target = $region49
    $region48: #{tpu_custom_call.1} parent=1 // pred_region
      %571 = dma.done [#allocation6], 2048
    $region49: #{tpu_custom_call.1} parent=1 // pred_fallthru
      _
    %572 = vsyncpa [#allocation5], 1
    %573 = vsyncpa [#allocation8], 1
    %574 = vsyncpa [#allocation11], 1
    %575 = vsyncpa [#allocation6], 1

// kernel: tpu_custom_call.1
$region0: #{tpu_custom_call.1}
  #allocation0 [shape = 'u32[]', space=smem, size = 0x4, offset = 0x4, fixed_abs, tag = 'smem constant byte address 0x4 - core index']
  #allocation1 [shape = 'u32[72,128]{1,0:T(1,128)}', space=vmem, size = 0x9000, scoped, tag = 'internal scratch']
  #allocation2 [shape = 'f32[16,128]{1,0:T(8,128)}', space=vmem, size = 0x2000, scoped, tag = 'scratch operand']
  #allocation3 [shape = 'f32[8,16,128]{2,1,0:T(8,128)}', space=vmem, size = 0x10000, scoped, tag = 'scratch operand']
  %s0 = inlined_call_operand.hbm [shape: bf16[8,16,128], index: 0, kind: input, shape index: {}]
  %s1 = inlined_call_operand.hbm [shape: f32[16,128], index: 1, kind: input, shape index: {}]
  %s2 = inlined_call_operand.hbm [shape: bf16[128,128], index: 2, kind: input, shape index: {}]
  %s3 = inlined_call_operand.hbm [shape: bf16[128,128], index: 3, kind: input, shape index: {}]
  %s4 = inlined_call_operand.vmem [shape: f32[1,128], index: 4, kind: input, shape index: {}]
  %s5 = inlined_call_operand.hbm [shape: f32[8,16,128], index: 5, kind: output, shape index: {}]
  %s6 = sld [smem:[#allocation0]]
  $region50: #{tpu_custom_call.1} parent=0
    _
  %s8 = ssub.s32 1, %s6
  %s9 = scalar_select 0, %s8, %s6
  $region1: #{tpu_custom_call.1} parent=0
    #allocation4 [shape = 'u8[32768]{0}', space=vmem, size = 0x8000, scoped, tag = 'input window, operand 0, single buffered']
    #allocation5 [shape = 's32[1]{0}', space=sflag, size = 0x4, scoped, tag = 'scoped memory for tpu_custom_call.1']
    #allocation6 [shape = 's32[1]{0}', space=sflag, size = 0x4, scoped, tag = 'scoped memory for tpu_custom_call.1']
    #allocation7 [shape = 'u8[8192]{0}', space=vmem, size = 0x2000, scoped, tag = 'input window, operand 1, single buffered']
    #allocation8 [shape = 's32[1]{0}', space=sflag, size = 0x4, scoped, tag = 'scoped memory for tpu_custom_call.1']
    #allocation9 [shape = 'u8[32768]{0}', space=vmem, size = 0x8000, scoped, tag = 'input window, operand 2, single buffered']
    #allocation10 [shape = 'u8[32768]{0}', space=vmem, size = 0x8000, scoped, tag = 'input window, operand 3, single buffered']
    #allocation11 [shape = 's32[1]{0}', space=sflag, size = 0x4, scoped, tag = 'scoped memory for tpu_custom_call.1']
    #allocation12 [shape = 'u8[65536]{0}', space=vmem, size = 0x10000, scoped, tag = 'output window, operand 0, single buffered']
    %10 = vsyncpa [#allocation5], 0
    %11 = vsyncpa [#allocation8], 0
    %12 = vsyncpa [#allocation11], 0
    %13 = vsyncpa [#allocation6], 0
    // Predicated region
    $region2: #{tpu_custom_call.1} parent=1 // pred_check
      _
    $region3: #{tpu_custom_call.1} parent=1 // pred_check_branch
      %15 = sbr.rel (0) target = $region5
    $region4: #{tpu_custom_call.1} parent=1 // pred_region
      %17 = vsyncadd [#allocation5], 0
      %s18 = sshll.u32 %s0, 4
      %s19 = int_to_ptr.hbm [resolvable:$true] %s18
      %s20 = sshll.u32 [#allocation4], 4
      %s21 = int_to_ptr.vmem [resolvable:$true] %s20
      %26 = dma.hbm_to_vmem [thread:$0]  %s19, 1024, %s21, [#allocation5], 64, 64, 4
    $region5: #{tpu_custom_call.1} parent=1 // pred_fallthru
      _
    // Predicated region
    $region6: #{tpu_custom_call.1} parent=1 // pred_check
      _
    $region7: #{tpu_custom_call.1} parent=1 // pred_check_branch
      %28 = sbr.rel (0) target = $region9
    $region8: #{tpu_custom_call.1} parent=1 // pred_region
      %30 = vsyncadd [#allocation8], 0
      %s31 = sshll.u32 %s1, 4
      %s32 = int_to_ptr.hbm [resolvable:$true] %s31
      %s33 = sshll.u32 [#allocation7], 4
      %s34 = int_to_ptr.vmem [resolvable:$true] %s33
      %39 = dma.hbm_to_vmem [thread:$0]  %s32, 256, %s34, [#allocation8], 128, 128, 8
    $region9: #{tpu_custom_call.1} parent=1 // pred_fallthru
      _
    // Predicated region
    $region10: #{tpu_custom_call.1} parent=1 // pred_check
      _
    $region11: #{tpu_custom_call.1} parent=1 // pred_check_branch
      %41 = sbr.rel (0) target = $region13
    $region12: #{tpu_custom_call.1} parent=1 // pred_region
      %43 = vsyncadd [#allocation8], 0
      %s44 = sshll.u32 %s2, 4
      %s45 = int_to_ptr.hbm [resolvable:$true] %s44
      %s46 = sshll.u32 [#allocation9], 4
      %s47 = int_to_ptr.vmem [resolvable:$true] %s46
      %52 = dma.hbm_to_vmem [thread:$0]  %s45, 1024, %s47, [#allocation8], 64, 64, 4
    $region13: #{tpu_custom_call.1} parent=1 // pred_fallthru
      _
    // Predicated region
    $region14: #{tpu_custom_call.1} parent=1 // pred_check
      _
    $region15: #{tpu_custom_call.1} parent=1 // pred_check_branch
      %54 = sbr.rel (0) target = $region17
    $region16: #{tpu_custom_call.1} parent=1 // pred_region
      %56 = vsyncadd [#allocation11], 0
      %s57 = sshll.u32 %s3, 4
      %s58 = int_to_ptr.hbm [resolvable:$true] %s57
      %s59 = sshll.u32 [#allocation10], 4
      %s60 = int_to_ptr.vmem [resolvable:$true] %s59
      %65 = dma.hbm_to_vmem [thread:$0]  %s58, 1024, %s60, [#allocation11], 64, 64, 4
    $region17: #{tpu_custom_call.1} parent=1 // pred_fallthru
      _
    // Predicated region
    $region18: #{tpu_custom_call.1} parent=1 // pred_check
      _
    $region19: #{tpu_custom_call.1} parent=1 // pred_check_branch
      %67 = sbr.rel (0) target = $region21
    $region20: #{tpu_custom_call.1} parent=1 // pred_region
      _
    $region21: #{tpu_custom_call.1} parent=1 // pred_fallthru
      _
    // Predicated region
    $region22: #{tpu_custom_call.1} parent=1 // pred_check
      _
    $region23: #{tpu_custom_call.1} parent=1 // pred_check_branch
      %69 = sbr.rel (0) target = $region25
    $region24: #{tpu_custom_call.1} parent=1 // pred_region
      %71 = dma.done [#allocation5], 1024
    $region25: #{tpu_custom_call.1} parent=1 // pred_fallthru
      _
    // Predicated region
    $region26: #{tpu_custom_call.1} parent=1 // pred_check
      _
    $region27: #{tpu_custom_call.1} parent=1 // pred_check_branch
      %73 = sbr.rel (0) target = $region29
    $region28: #{tpu_custom_call.1} parent=1 // pred_region
      %75 = dma.done [#allocation8], 256
    $region29: #{tpu_custom_call.1} parent=1 // pred_fallthru
      _
    // Predicated region
    $region30: #{tpu_custom_call.1} parent=1 // pred_check
      _
    $region31: #{tpu_custom_call.1} parent=1 // pred_check_branch
      %77 = sbr.rel (0) target = $region33
    $region32: #{tpu_custom_call.1} parent=1 // pred_region
      %79 = dma.done [#allocation8], 1024
    $region33: #{tpu_custom_call.1} parent=1 // pred_fallthru
      _
    // Predicated region
    $region34: #{tpu_custom_call.1} parent=1 // pred_check
      _
    $region35: #{tpu_custom_call.1} parent=1 // pred_check_branch
      %81 = sbr.rel (0) target = $region37
    $region36: #{tpu_custom_call.1} parent=1 // pred_region
      %83 = dma.done [#allocation11], 1024
    $region37: #{tpu_custom_call.1} parent=1 // pred_fallthru
      _
    %p84 = scmp.eq.s32.totalorder 0, 0
    // Predicated region
    $region38: #{tpu_custom_call.1} parent=1 // pred_check
      %p85 = pneg %p84
    $region39: #{tpu_custom_call.1} parent=1 // pred_check_branch
      %87 = sbr.rel (%p85) target = $region41
    $region40: #{tpu_custom_call.1} parent=1 // pred_region
      %v88 = vld [vmem:[#allocation7] sm:$0xff]
      %v89 = vld [vmem:[#allocation7 + $0x8] sm:$0xff]
      %90 = vst [vmem:[#allocation2] sm:$0xff] %v88
      %91 = vst [vmem:[#allocation2 + $0x8] sm:$0xff] %v89
    $region41: #{tpu_custom_call.1} parent=1 // pred_fallthru
      _
    %v92 = vld [vmem:[#allocation4] sm:$0xf]
    %v93 = vld [vmem:[#allocation4 + $0x4] sm:$0xf]
    %v94 = vld [vmem:[#allocation4 + $0x8] sm:$0xf]
    %v95 = vld [vmem:[#allocation4 + $0xc] sm:$0xf]
    %v96 = vld [vmem:[#allocation4 + $0x10] sm:$0xf]
    %v97 = vld [vmem:[#allocation4 + $0x14] sm:$0xf]
    %v98 = vld [vmem:[#allocation4 + $0x18] sm:$0xf]
    %v99 = vld [vmem:[#allocation4 + $0x1c] sm:$0xf]
    %v100 = vld [vmem:[#allocation4 + $0x20] sm:$0xf]
    %v101 = vld [vmem:[#allocation4 + $0x24] sm:$0xf]
    %v102 = vld [vmem:[#allocation4 + $0x28] sm:$0xf]
    %v103 = vld [vmem:[#allocation4 + $0x2c] sm:$0xf]
    %v104 = vld [vmem:[#allocation4 + $0x30] sm:$0xf]
    %v105 = vld [vmem:[#allocation4 + $0x34] sm:$0xf]
    %v106 = vld [vmem:[#allocation4 + $0x38] sm:$0xf]
    %v107 = vld [vmem:[#allocation4 + $0x3c] sm:$0xf]
    %v108 = vld [vmem:[#allocation9] sm:$0xf]
    %v109 = vld [vmem:[#allocation9 + $0x4] sm:$0xf]
    %v110 = vld [vmem:[#allocation9 + $0x8] sm:$0xf]
    %v111 = vld [vmem:[#allocation9 + $0xc] sm:$0xf]
    %v112 = vld [vmem:[#allocation9 + $0x10] sm:$0xf]
    %v113 = vld [vmem:[#allocation9 + $0x14] sm:$0xf]
    %v114 = vld [vmem:[#allocation9 + $0x18] sm:$0xf]
    %v115 = vld [vmem:[#allocation9 + $0x1c] sm:$0xf]
    %v116 = vld [vmem:[#allocation9 + $0x20] sm:$0xf]
    %v117 = vld [vmem:[#allocation9 + $0x24] sm:$0xf]
    %v118 = vld [vmem:[#allocation9 + $0x28] sm:$0xf]
    %v119 = vld [vmem:[#allocation9 + $0x2c] sm:$0xf]
    %v120 = vld [vmem:[#allocation9 + $0x30] sm:$0xf]
    %v121 = vld [vmem:[#allocation9 + $0x34] sm:$0xf]
    %v122 = vld [vmem:[#allocation9 + $0x38] sm:$0xf]
    %v123 = vld [vmem:[#allocation9 + $0x3c] sm:$0xf]
    %v124 = vld [vmem:[%s4] sm:$0x1]
    %v126 = vperm.slane %v124, 0
    %v144 = vunpack.c.l.b16 %v92
    %v145 = vunpack.c.l.b16 %v93
    %v146 = vunpack.c.l.b16 %v94
    %v147 = vunpack.c.l.b16 %v95
    %v148 = vunpack.c.l.b16 %v96
    %v149 = vunpack.c.l.b16 %v97
    %v150 = vunpack.c.l.b16 %v98
    %v151 = vunpack.c.l.b16 %v99
    %v152 = vunpack.c.l.b16 %v100
    %v153 = vunpack.c.l.b16 %v101
    %v154 = vunpack.c.l.b16 %v102
    %v155 = vunpack.c.l.b16 %v103
    %v156 = vunpack.c.l.b16 %v104
    %v157 = vunpack.c.l.b16 %v105
    %v158 = vunpack.c.l.b16 %v106
    %v159 = vunpack.c.l.b16 %v107
    %v160 = vpack.c.b16 %v145, %v144
    %v161 = vpack.c.b16 %v147, %v146
    %v162 = vpack.c.b16 %v149, %v148
    %v163 = vpack.c.b16 %v151, %v150
    %v164 = vpack.c.b16 %v153, %v152
    %v165 = vpack.c.b16 %v155, %v154
    %v166 = vpack.c.b16 %v157, %v156
    %v167 = vpack.c.b16 %v159, %v158
    %v192 = vunpack.c.l.b16 %v108
    %v193 = vunpack.c.l.b16 %v109
    %v194 = vunpack.c.l.b16 %v110
    %v195 = vunpack.c.l.b16 %v111
    %v196 = vunpack.c.l.b16 %v112
    %v197 = vunpack.c.l.b16 %v113
    %v198 = vunpack.c.l.b16 %v114
    %v199 = vunpack.c.l.b16 %v115
    %v200 = vunpack.c.l.b16 %v116
    %v201 = vunpack.c.l.b16 %v117
    %v202 = vunpack.c.l.b16 %v118
    %v203 = vunpack.c.l.b16 %v119
    %v204 = vunpack.c.l.b16 %v120
    %v205 = vunpack.c.l.b16 %v121
    %v206 = vunpack.c.l.b16 %v122
    %v207 = vunpack.c.l.b16 %v123
    %v208 = vpack.c.b16 %v193, %v192
    %v209 = vpack.c.b16 %v195, %v194
    %v210 = vpack.c.b16 %v197, %v196
    %v211 = vpack.c.b16 %v199, %v198
    %v212 = vpack.c.b16 %v201, %v200
    %v213 = vpack.c.b16 %v203, %v202
    %v214 = vpack.c.b16 %v205, %v204
    %v215 = vpack.c.b16 %v207, %v206
    %224 = vmatpush.bf16.msra.mxu0 %v215
    %225 = vmatpush.bf16.msra.mxu0 %v214
    %226 = vmatpush.bf16.msra.mxu0 %v213
    %227 = vmatpush.bf16.msra.mxu0 %v212
    %228 = vmatpush.bf16.msra.mxu0 %v211
    %229 = vmatpush.bf16.msra.mxu0 %v210
    %230 = vmatpush.bf16.msra.mxu0 %v209
    %231 = vmatpush.bf16.msra.mxu0 %v208
    %232 = vmatmul.bf16.gmra.mxu0 %v160
    %v233 = vpop.f32.mrf.mxu0
    %v234 = vadd.f32 %v126, %v233
    %v235 = vpop.f32.mrf.mxu0
    %v236 = vadd.f32 %v126, %v235
    %237 = vmatmul.bf16.gmra.mxu0 %v161
    %v238 = vpop.f32.mrf.mxu0
    %v239 = vadd.f32 %v126, %v238
    %v240 = vpop.f32.mrf.mxu0
    %v241 = vadd.f32 %v126, %v240
    %242 = vmatmul.bf16.gmra.mxu0 %v162
    %v243 = vpop.f32.mrf.mxu0
    %v244 = vadd.f32 %v126, %v243
    %v245 = vpop.f32.mrf.mxu0
    %v246 = vadd.f32 %v126, %v245
    %247 = vmatmul.bf16.gmra.mxu0 %v163
    %v248 = vpop.f32.mrf.mxu0
    %v249 = vadd.f32 %v126, %v248
    %v250 = vpop.f32.mrf.mxu0
    %v251 = vadd.f32 %v126, %v250
    %252 = vmatmul.bf16.gmra.mxu0 %v164
    %v253 = vpop.f32.mrf.mxu0
    %v254 = vadd.f32 %v126, %v253
    %v255 = vpop.f32.mrf.mxu0
    %v256 = vadd.f32 %v126, %v255
    %257 = vmatmul.bf16.gmra.mxu0 %v165
    %v258 = vpop.f32.mrf.mxu0
    %v259 = vadd.f32 %v126, %v258
    %v260 = vpop.f32.mrf.mxu0
    %v261 = vadd.f32 %v126, %v260
    %262 = vmatmul.bf16.gmra.mxu0 %v166
    %v263 = vpop.f32.mrf.mxu0
    %v264 = vadd.f32 %v126, %v263
    %v265 = vpop.f32.mrf.mxu0
    %v266 = vadd.f32 %v126, %v265
    %267 = vmatmul.bf16.gmra.mxu0 %v167
    %v268 = vpop.f32.mrf.mxu0
    %v269 = vadd.f32 %v126, %v268
    %v270 = vpop.f32.mrf.mxu0
    %v271 = vadd.f32 %v126, %v270
    %272 = vdwg.mxu0
    %273 = vst [vmem:[#allocation3] sm:$0xff] %v234
    %274 = vst [vmem:[#allocation3 + $0x8] sm:$0xff] %v236
    %275 = vst [vmem:[#allocation3 + $0x10] sm:$0xff] %v239
    %276 = vst [vmem:[#allocation3 + $0x18] sm:$0xff] %v241
    %277 = vst [vmem:[#allocation3 + $0x20] sm:$0xff] %v244
    %278 = vst [vmem:[#allocation3 + $0x28] sm:$0xff] %v246
    %279 = vst [vmem:[#allocation3 + $0x30] sm:$0xff] %v249
    %280 = vst [vmem:[#allocation3 + $0x38] sm:$0xff] %v251
    %281 = vst [vmem:[#allocation3 + $0x40] sm:$0xff] %v254
    %282 = vst [vmem:[#allocation3 + $0x48] sm:$0xff] %v256
    %283 = vst [vmem:[#allocation3 + $0x50] sm:$0xff] %v259
    %284 = vst [vmem:[#allocation3 + $0x58] sm:$0xff] %v261
    %285 = vst [vmem:[#allocation3 + $0x60] sm:$0xff] %v264
    %286 = vst [vmem:[#allocation3 + $0x68] sm:$0xff] %v266
    %287 = vst [vmem:[#allocation3 + $0x70] sm:$0xff] %v269
    %288 = vst [vmem:[#allocation3 + $0x78] sm:$0xff] %v271
    %v289 = vld [vmem:[#allocation10] sm:$0xf]
    %v290 = vld [vmem:[#allocation10 + $0x4] sm:$0xf]
    %v291 = vld [vmem:[#allocation10 + $0x8] sm:$0xf]
    %v292 = vld [vmem:[#allocation10 + $0xc] sm:$0xf]
    %v293 = vld [vmem:[#allocation10 + $0x10] sm:$0xf]
    %v294 = vld [vmem:[#allocation10 + $0x14] sm:$0xf]
    %v295 = vld [vmem:[#allocation10 + $0x18] sm:$0xf]
    %v296 = vld [vmem:[#allocation10 + $0x1c] sm:$0xf]
    %v297 = vld [vmem:[#allocation10 + $0x20] sm:$0xf]
    %v298 = vld [vmem:[#allocation10 + $0x24] sm:$0xf]
    %v299 = vld [vmem:[#allocation10 + $0x28] sm:$0xf]
    %v300 = vld [vmem:[#allocation10 + $0x2c] sm:$0xf]
    %v301 = vld [vmem:[#allocation10 + $0x30] sm:$0xf]
    %v302 = vld [vmem:[#allocation10 + $0x34] sm:$0xf]
    %v303 = vld [vmem:[#allocation10 + $0x38] sm:$0xf]
    %v304 = vld [vmem:[#allocation10 + $0x3c] sm:$0xf]
    %v305 = vld [vmem:[#allocation2] sm:$0xff]
    %v306 = vld [vmem:[#allocation2 + $0x8] sm:$0xff]
    %v307 = vpack.c.bf16 %v306, %v305
    %v324 = vunpack.c.l.b16 %v289
    %v325 = vunpack.c.l.b16 %v290
    %v326 = vunpack.c.l.b16 %v291
    %v327 = vunpack.c.l.b16 %v292
    %v328 = vunpack.c.l.b16 %v293
    %v329 = vunpack.c.l.b16 %v294
    %v330 = vunpack.c.l.b16 %v295
    %v331 = vunpack.c.l.b16 %v296
    %v332 = vunpack.c.l.b16 %v297
    %v333 = vunpack.c.l.b16 %v298
    %v334 = vunpack.c.l.b16 %v299
    %v335 = vunpack.c.l.b16 %v300
    %v336 = vunpack.c.l.b16 %v301
    %v337 = vunpack.c.l.b16 %v302
    %v338 = vunpack.c.l.b16 %v303
    %v339 = vunpack.c.l.b16 %v304
    %v340 = vpack.c.b16 %v325, %v324
    %v341 = vpack.c.b16 %v327, %v326
    %v342 = vpack.c.b16 %v329, %v328
    %v343 = vpack.c.b16 %v331, %v330
    %v344 = vpack.c.b16 %v333, %v332
    %v345 = vpack.c.b16 %v335, %v334
    %v346 = vpack.c.b16 %v337, %v336
    %v347 = vpack.c.b16 %v339, %v338
    %356 = vmatpush.bf16.msra.mxu0 %v347
    %357 = vmatpush.bf16.msra.mxu0 %v346
    %358 = vmatpush.bf16.msra.mxu0 %v345
    %359 = vmatpush.bf16.msra.mxu0 %v344
    %360 = vmatpush.bf16.msra.mxu0 %v343
    %361 = vmatpush.bf16.msra.mxu0 %v342
    %362 = vmatpush.bf16.msra.mxu0 %v341
    %363 = vmatpush.bf16.msra.mxu0 %v340
    %364 = vmatmul.bf16.gmra.mxu0 %v307
    %v365 = vpop.f32.mrf.mxu0
    %v366 = vadd.f32 0.0, %v365
    %v367 = vpop.f32.mrf.mxu0
    %v368 = vadd.f32 0.0, %v367
    %369 = vdwg.mxu0
    %v370 = vld [vmem:[#allocation3] sm:$0xff]
    %v371 = vld [vmem:[#allocation3 + $0x8] sm:$0xff]
    %v372 = vadd.f32 %v370, %v366
    %v373 = vadd.f32 %v371, %v368
    %v374 = vtanh.pop %v372
    %v375 = vtanh.pop %v373
    %376 = vst [vmem:[#allocation12] sm:$0xff] %v374
    %377 = vst [vmem:[#allocation12 + $0x8] sm:$0xff] %v375
    %v378 = vpack.c.bf16 %v375, %v374
    %379 = vmatpush.bf16.msra.mxu0 %v347
    %380 = vmatpush.bf16.msra.mxu0 %v346
    %381 = vmatpush.bf16.msra.mxu0 %v345
    %382 = vmatpush.bf16.msra.mxu0 %v344
    %383 = vmatpush.bf16.msra.mxu0 %v343
    %384 = vmatpush.bf16.msra.mxu0 %v342
    %385 = vmatpush.bf16.msra.mxu0 %v341
    %386 = vmatpush.bf16.msra.mxu0 %v340
    %387 = vmatmul.bf16.gmra.mxu0 %v378
    %v388 = vpop.f32.mrf.mxu0
    %v389 = vadd.f32 0.0, %v388
    %v390 = vpop.f32.mrf.mxu0
    %v391 = vadd.f32 0.0, %v390
    %392 = vdwg.mxu0
    %s393 = scalar_lea.vmem [#allocation3], 16
    %v394 = vld [vmem:[%s393] sm:$0xff]
    %v395 = vld [vmem:[%s393 + $0x8] sm:$0xff]
    %v396 = vadd.f32 %v394, %v389
    %v397 = vadd.f32 %v395, %v391
    %v398 = vtanh.pop %v396
    %v399 = vtanh.pop %v397
    %s400 = scalar_lea.vmem [#allocation12], 16
    %401 = vst [vmem:[%s400] sm:$0xff] %v398
    %402 = vst [vmem:[%s400 + $0x8] sm:$0xff] %v399
    %v403 = vpack.c.bf16 %v399, %v398
    %404 = vmatpush.bf16.msra.mxu0 %v347
    %405 = vmatpush.bf16.msra.mxu0 %v346
    %406 = vmatpush.bf16.msra.mxu0 %v345
    %407 = vmatpush.bf16.msra.mxu0 %v344
    %408 = vmatpush.bf16.msra.mxu0 %v343
    %409 = vmatpush.bf16.msra.mxu0 %v342
    %410 = vmatpush.bf16.msra.mxu0 %v341
    %411 = vmatpush.bf16.msra.mxu0 %v340
    %412 = vmatmul.bf16.gmra.mxu0 %v403
    %v413 = vpop.f32.mrf.mxu0
    %v414 = vadd.f32 0.0, %v413
    %v415 = vpop.f32.mrf.mxu0
    %v416 = vadd.f32 0.0, %v415
    %417 = vdwg.mxu0
    %s418 = scalar_lea.vmem [#allocation3], 32
    %v419 = vld [vmem:[%s418] sm:$0xff]
    %v420 = vld [vmem:[%s418 + $0x8] sm:$0xff]
    %v421 = vadd.f32 %v419, %v414
    %v422 = vadd.f32 %v420, %v416
    %v423 = vtanh.pop %v421
    %v424 = vtanh.pop %v422
    %s425 = scalar_lea.vmem [#allocation12], 32
    %426 = vst [vmem:[%s425] sm:$0xff] %v423
    %427 = vst [vmem:[%s425 + $0x8] sm:$0xff] %v424
    %v428 = vpack.c.bf16 %v424, %v423
    %429 = vmatpush.bf16.msra.mxu0 %v347
    %430 = vmatpush.bf16.msra.mxu0 %v346
    %431 = vmatpush.bf16.msra.mxu0 %v345
    %432 = vmatpush.bf16.msra.mxu0 %v344
    %433 = vmatpush.bf16.msra.mxu0 %v343
    %434 = vmatpush.bf16.msra.mxu0 %v342
    %435 = vmatpush.bf16.msra.mxu0 %v341
    %436 = vmatpush.bf16.msra.mxu0 %v340
    %437 = vmatmul.bf16.gmra.mxu0 %v428
    %v438 = vpop.f32.mrf.mxu0
    %v439 = vadd.f32 0.0, %v438
    %v440 = vpop.f32.mrf.mxu0
    %v441 = vadd.f32 0.0, %v440
    %442 = vdwg.mxu0
    %s443 = scalar_lea.vmem [#allocation3], 48
    %v444 = vld [vmem:[%s443] sm:$0xff]
    %v445 = vld [vmem:[%s443 + $0x8] sm:$0xff]
    %v446 = vadd.f32 %v444, %v439
    %v447 = vadd.f32 %v445, %v441
    %v448 = vtanh.pop %v446
    %v449 = vtanh.pop %v447
    %s450 = scalar_lea.vmem [#allocation12], 48
    %451 = vst [vmem:[%s450] sm:$0xff] %v448
    %452 = vst [vmem:[%s450 + $0x8] sm:$0xff] %v449
    %v453 = vpack.c.bf16 %v449, %v448
    %454 = vmatpush.bf16.msra.mxu0 %v347
    %455 = vmatpush.bf16.msra.mxu0 %v346
    %456 = vmatpush.bf16.msra.mxu0 %v345
    %457 = vmatpush.bf16.msra.mxu0 %v344
    %458 = vmatpush.bf16.msra.mxu0 %v343
    %459 = vmatpush.bf16.msra.mxu0 %v342
    %460 = vmatpush.bf16.msra.mxu0 %v341
    %461 = vmatpush.bf16.msra.mxu0 %v340
    %462 = vmatmul.bf16.gmra.mxu0 %v453
    %v463 = vpop.f32.mrf.mxu0
    %v464 = vadd.f32 0.0, %v463
    %v465 = vpop.f32.mrf.mxu0
    %v466 = vadd.f32 0.0, %v465
    %467 = vdwg.mxu0
    %s468 = scalar_lea.vmem [#allocation3], 64
    %v469 = vld [vmem:[%s468] sm:$0xff]
    %v470 = vld [vmem:[%s468 + $0x8] sm:$0xff]
    %v471 = vadd.f32 %v469, %v464
    %v472 = vadd.f32 %v470, %v466
    %v473 = vtanh.pop %v471
    %v474 = vtanh.pop %v472
    %s475 = scalar_lea.vmem [#allocation12], 64
    %476 = vst [vmem:[%s475] sm:$0xff] %v473
    %477 = vst [vmem:[%s475 + $0x8] sm:$0xff] %v474
    %v478 = vpack.c.bf16 %v474, %v473
    %479 = vmatpush.bf16.msra.mxu0 %v347
    %480 = vmatpush.bf16.msra.mxu0 %v346
    %481 = vmatpush.bf16.msra.mxu0 %v345
    %482 = vmatpush.bf16.msra.mxu0 %v344
    %483 = vmatpush.bf16.msra.mxu0 %v343
    %484 = vmatpush.bf16.msra.mxu0 %v342
    %485 = vmatpush.bf16.msra.mxu0 %v341
    %486 = vmatpush.bf16.msra.mxu0 %v340
    %487 = vmatmul.bf16.gmra.mxu0 %v478
    %v488 = vpop.f32.mrf.mxu0
    %v489 = vadd.f32 0.0, %v488
    %v490 = vpop.f32.mrf.mxu0
    %v491 = vadd.f32 0.0, %v490
    %492 = vdwg.mxu0
    %s493 = scalar_lea.vmem [#allocation3], 80
    %v494 = vld [vmem:[%s493] sm:$0xff]
    %v495 = vld [vmem:[%s493 + $0x8] sm:$0xff]
    %v496 = vadd.f32 %v494, %v489
    %v497 = vadd.f32 %v495, %v491
    %v498 = vtanh.pop %v496
    %v499 = vtanh.pop %v497
    %s500 = scalar_lea.vmem [#allocation12], 80
    %501 = vst [vmem:[%s500] sm:$0xff] %v498
    %502 = vst [vmem:[%s500 + $0x8] sm:$0xff] %v499
    %v503 = vpack.c.bf16 %v499, %v498
    %504 = vmatpush.bf16.msra.mxu0 %v347
    %505 = vmatpush.bf16.msra.mxu0 %v346
    %506 = vmatpush.bf16.msra.mxu0 %v345
    %507 = vmatpush.bf16.msra.mxu0 %v344
    %508 = vmatpush.bf16.msra.mxu0 %v343
    %509 = vmatpush.bf16.msra.mxu0 %v342
    %510 = vmatpush.bf16.msra.mxu0 %v341
    %511 = vmatpush.bf16.msra.mxu0 %v340
    %512 = vmatmul.bf16.gmra.mxu0 %v503
    %v513 = vpop.f32.mrf.mxu0
    %v514 = vadd.f32 0.0, %v513
    %v515 = vpop.f32.mrf.mxu0
    %v516 = vadd.f32 0.0, %v515
    %517 = vdwg.mxu0
    %s518 = scalar_lea.vmem [#allocation3], 96
    %v519 = vld [vmem:[%s518] sm:$0xff]
    %v520 = vld [vmem:[%s518 + $0x8] sm:$0xff]
    %v521 = vadd.f32 %v519, %v514
    %v522 = vadd.f32 %v520, %v516
    %v523 = vtanh.pop %v521
    %v524 = vtanh.pop %v522
    %s525 = scalar_lea.vmem [#allocation12], 96
    %526 = vst [vmem:[%s525] sm:$0xff] %v523
    %527 = vst [vmem:[%s525 + $0x8] sm:$0xff] %v524
    %v528 = vpack.c.bf16 %v524, %v523
    %529 = vmatpush.bf16.msra.mxu0 %v347
    %530 = vmatpush.bf16.msra.mxu0 %v346
    %531 = vmatpush.bf16.msra.mxu0 %v345
    %532 = vmatpush.bf16.msra.mxu0 %v344
    %533 = vmatpush.bf16.msra.mxu0 %v343
    %534 = vmatpush.bf16.msra.mxu0 %v342
    %535 = vmatpush.bf16.msra.mxu0 %v341
    %536 = vmatpush.bf16.msra.mxu0 %v340
    %537 = vmatmul.bf16.gmra.mxu0 %v528
    %v538 = vpop.f32.mrf.mxu0
    %v539 = vadd.f32 0.0, %v538
    %v540 = vpop.f32.mrf.mxu0
    %v541 = vadd.f32 0.0, %v540
    %542 = vdwg.mxu0
    %s543 = scalar_lea.vmem [#allocation3], 112
    %v544 = vld [vmem:[%s543] sm:$0xff]
    %v545 = vld [vmem:[%s543 + $0x8] sm:$0xff]
    %v546 = vadd.f32 %v544, %v539
    %v547 = vadd.f32 %v545, %v541
    %v548 = vtanh.pop %v546
    %v549 = vtanh.pop %v547
    %s550 = scalar_lea.vmem [#allocation12], 112
    %551 = vst [vmem:[%s550] sm:$0xff] %v548
    %552 = vst [vmem:[%s550 + $0x8] sm:$0xff] %v549
    %553 = vst [vmem:[#allocation2] sm:$0xff] %v548
    %554 = vst [vmem:[#allocation2 + $0x8] sm:$0xff] %v549
    // Predicated region
    $region42: #{tpu_custom_call.1} parent=1 // pred_check
      _
    $region43: #{tpu_custom_call.1} parent=1 // pred_check_branch
      %556 = sbr.rel (0) target = $region45
    $region44: #{tpu_custom_call.1} parent=1 // pred_region
      %558 = vsyncadd [#allocation6], 0
      %s559 = sshll.u32 [#allocation12], 4
      %s560 = int_to_ptr.vmem [resolvable:$true] %s559
      %s561 = sshll.u32 %s5, 4
      %s562 = int_to_ptr.hbm [resolvable:$true] %s561
      %567 = dma.vmem_to_hbm [thread:$0]  %s560, 2048, %s562, [#allocation6], 128, 128, 8
    $region45: #{tpu_custom_call.1} parent=1 // pred_fallthru
      _
    // Predicated region
    $region46: #{tpu_custom_call.1} parent=1 // pred_check
      _
    $region47: #{tpu_custom_call.1} parent=1 // pred_check_branch
      %569 = sbr.rel (0) target = $region49
    $region48: #{tpu_custom_call.1} parent=1 // pred_region
      %571 = dma.done [#allocation6], 2048
    $region49: #{tpu_custom_call.1} parent=1 // pred_fallthru
      _
    %572 = vsyncpa [#allocation5], 1
    %573 = vsyncpa [#allocation8], 1
    %574 = vsyncpa [#allocation11], 1
    %575 = vsyncpa [#allocation6], 1

</llo_original>
